<compile_context>
chip_gen: v7x
topology: tpu7x:2x2x1
jax: 0.10.0
libtpu: 0.0.40
codegen_flags: <defaults>
</compile_context>

<pallas_src>
import math

import jax
import jax.numpy as jnp
from jax.experimental import pallas as pl
from jax.experimental.pallas import tpu as pltpu

# ----------------------------- model dims -----------------------------------
B, C, H, W = 2, 4, 16, 16          # img: (B, C, H, W)  NCHW
FLAT = C * H * W                   # 1024 (lane-dense: multiple of 128)
D_LAT = 32                         # auto-encoder latent dim
D_UP = 64                          # dim_up_mlp output dim
D_COND = 32                        # conditioning `c` dim
D_HID = 256                        # decoder / denoiser hidden dim
D_TEMB = 32                        # timestep embedding dim
LANE = 128                         # TPU lane width: narrow outputs padded to it
IMG_SIZE = (C, H, W)               # analogue of self.img_size


# ----------------------------- in-kernel helpers ------------------------------
def _temb(t_col):
    """Sinusoidal timestep embedding computed in-kernel.

    t_col: (rows, 1) f32  ->  (rows, D_TEMB) f32.  iota/exp/cos/sin land on the
    EUP slot, which is idle in these matmul-dominated kernels.
    """
    half = D_TEMB // 2
    idx = jax.lax.broadcasted_iota(jnp.float32, (1, half), 1)
    freqs = jnp.exp((-math.log(10000.0) / half) * idx)           # (1, half)
    ang = t_col * freqs                                          # (rows, half)
    return jnp.concatenate([jnp.cos(ang), jnp.sin(ang)], axis=-1)


# ----------------------------- Pallas kernels --------------------------------
def _enc_dec_kernel(x_ref, c_ref, enc_w_ref, enc_b_ref,
                    dec_w1c_ref, dec_b1_ref, dec_w2_ref, dec_b2_ref, o_ref):
    """Fused auto_encoder(img, c): encode -> conditioned decoder MLP.

    The latent z never leaves VMEM/vregs and the decoder's first layer is a
    single K=64 MXU pass against the stacked [W1 ; Wc] weight.
    """
    z = jnp.dot(x_ref[...].astype(jnp.bfloat16), enc_w_ref[...],
                preferred_element_type=jnp.float32) + enc_b_ref[...]
    zc = jnp.concatenate([z, c_ref[...]], axis=-1)               # (B, 64) f32
    h = jnp.dot(zc.astype(jnp.bfloat16), dec_w1c_ref[...],
                preferred_element_type=jnp.float32) + dec_b1_ref[...]
    h = h * jax.nn.sigmoid(h)                                    # SiLU (f32)
    y = jnp.dot(h.astype(jnp.bfloat16), dec_w2_ref[...],
                preferred_element_type=jnp.float32) + dec_b2_ref[...]
    o_ref[...] = y.astype(o_ref.dtype)


def _cond_mlp_kernel(zc_ref, w1_ref, b1_ref, w2_ref, b2_ref, o_ref):
    """2-layer MLP on a pre-concatenated input (used for 'dec')."""
    h = jnp.dot(zc_ref[...].astype(jnp.bfloat16), w1_ref[...],
                preferred_element_type=jnp.float32) + b1_ref[...]
    h = h * jax.nn.sigmoid(h)                                    # SiLU (f32)
    y = jnp.dot(h.astype(jnp.bfloat16), w2_ref[...],
                preferred_element_type=jnp.float32) + b2_ref[...]
    o_ref[...] = y.astype(o_ref.dtype)


def _enc_up_kernel(x_ref, enc_w_ref, enc_b_ref, up_w_ref, up_b_ref, o_ref):
    """Fused encode + dim_up_mlp; latent stays on-chip; output is lane-padded
    to 128 columns (zero weight columns) so the store is lane-dense."""
    z = jnp.dot(x_ref[...].astype(jnp.bfloat16), enc_w_ref[...],
                preferred_element_type=jnp.float32) + enc_b_ref[...]
    y = jnp.dot(z.astype(jnp.bfloat16), up_w_ref[...],
                preferred_element_type=jnp.float32) + up_b_ref[...]
    o_ref[...] = y.astype(o_ref.dtype)


def _denoise_kernel(x_ref, t_ref, c_ref, w1_ref, b1_ref, w2_ref, b2_ref, o_ref):
    """Single denoise step: in-kernel timestep embedding, one K=96 first-layer
    MXU pass against the stacked [Wx ; Wt ; Wc] weight, SiLU, K=256 pass."""
    temb = _temb(t_ref[...])                                     # (B, D_TEMB)
    xtc = jnp.concatenate([x_ref[...], temb, c_ref[...]], axis=-1)   # (B, 96)
    h = jnp.dot(xtc.astype(jnp.bfloat16), w1_ref[...],
                preferred_element_type=jnp.float32) + b1_ref[...]
    h = h * jax.nn.sigmoid(h)                                    # SiLU (f32)
    y = jnp.dot(h.astype(jnp.bfloat16), w2_ref[...],
                preferred_element_type=jnp.float32) + b2_ref[...]
    o_ref[...] = y.astype(o_ref.dtype)


def _sampler_kernel(t_ref, ca_ref, cb_ref, x0_ref, c_ref,
                    w1_ref, b1_ref, w2_ref, b2_ref, o_ref, x_scr):
    """Fused multi-step sampler: one grid step per diffusion step.

    Denoiser weights have constant block indices so Pallas keeps them resident
    in VMEM across the whole grid; the evolving latent lives in VMEM scratch;
    the timestep table is scalar-prefetched, the schedule lives in SMEM.
    """
    step = pl.program_id(0)

    @pl.when(step == 0)
    def _():
        x_scr[...] = x0_ref[...]

    t = t_ref[step].astype(jnp.float32)                          # SMEM scalar
    temb = _temb(t * jnp.ones((1, 1), jnp.float32))              # (1, D_TEMB)
    temb = jnp.broadcast_to(temb, (x_scr.shape[0], D_TEMB))
    xtc = jnp.concatenate([x_scr[...], temb, c_ref[...]], axis=-1)   # (B, 96)
    h = jnp.dot(xtc.astype(jnp.bfloat16), w1_ref[...],
                preferred_element_type=jnp.float32) + b1_ref[...]
    h = h * jax.nn.sigmoid(h)                                    # SiLU (f32)
    eps = jnp.dot(h.astype(jnp.bfloat16), w2_ref[...],
                  preferred_element_type=jnp.float32) + b2_ref[...]
    # DDIM-style update with per-step scalar schedule coefficients from SMEM.
    x_scr[...] = ca_ref[step] * x_scr[...] + cb_ref[step] * eps[:, :D_LAT]

    @pl.when(step == pl.num_programs(0) - 1)
    def _():
        o_ref[...] = x_scr[...]


# ----------------------------- pallas_call helpers ----------------------------
def _bytes_accessed(args, out_shape, out_bytes=4):
    n = sum(int(a.size) * a.dtype.itemsize for a in args)
    return n + math.prod(out_shape) * out_bytes


def _call(kernel, out_shape, flops, transcendentals, *args):
    """Single-shot (no grid) call: all operands pinned to VMEM whole-array
    blocks; cost estimate attached so XLA schedules the tiny kernel sanely."""
    ce = pl.CostEstimate(flops=int(flops),
                         transcendentals=int(transcendentals),
                         bytes_accessed=_bytes_accessed(args, out_shape))
    vmem = pltpu.MemorySpace.VMEM
    return pl.pallas_call(
        kernel,
        out_shape=jax.ShapeDtypeStruct(out_shape, jnp.float32),
        in_specs=[pl.BlockSpec(memory_space=vmem) for _ in args],
        out_specs=pl.BlockSpec(memory_space=vmem),
        cost_estimate=ce,
    )(*args)


# ----------------------------- parameters ------------------------------------
def init_params(key):
    ks = jax.random.split(key, 6)

    def w(k, shape):
        # bf16 storage (half the HBM->VMEM DMA); accumulation stays f32.
        return (jax.random.normal(k, shape, jnp.float32)
                / jnp.sqrt(jnp.float32(shape[0]))).astype(jnp.bfloat16)

    def pad_cols(m, n_to):                          # zero-pad N up to a full lane
        return jnp.pad(m, ((0, 0), (0, n_to - m.shape[1])))

    return dict(
        # encoder: flatten(img) @ W_enc + b_enc
        enc_w=w(ks[0], (FLAT, D_LAT)),
        enc_b=jnp.zeros((1, D_LAT), jnp.float32),
        # dim_up_mlp, N padded 64 -> 128 (lane-dense store; sliced in wrapper)
        up_w=pad_cols(w(ks[1], (D_LAT, D_UP)), LANE),
        up_b=jnp.zeros((1, LANE), jnp.float32),
        # decoder: [W1 (latent) ; Wc (cond)] stacked -> single (64, 256) weight
        dec_w1c=w(ks[2], (D_LAT + D_COND, D_HID)),
        dec_b1=jnp.zeros((1, D_HID), jnp.float32),
        dec_w2=w(ks[3], (D_HID, FLAT)),
        dec_b2=jnp.zeros((1, FLAT), jnp.float32),
        # denoiser: [Wx ; Wt ; Wc] stacked -> single (96, 256) weight
        den_w1=w(ks[4], (D_LAT + D_TEMB + D_COND, D_HID)),
        den_b1=jnp.zeros((1, D_HID), jnp.float32),
        # second layer N padded 32 -> 128 (lane-dense store; sliced in wrapper)
        den_w2=pad_cols(w(ks[5], (D_HID, D_LAT)), LANE),
        den_b2=jnp.zeros((1, LANE), jnp.float32),
    )


# ----------------------------- forward (mirrors PyTorch) ---------------------
def ae_with_diffusion_forward(params, img, c, behaviour="enc_dec", latent=None,
                              *args, **kwargs):
    c = c.astype(jnp.float32)

    if behaviour == "enc_dec":
        # pred = self.auto_encoder(img, c)  -- one fused kernel
        x = img.reshape(img.shape[0], -1).astype(jnp.float32)
        bsz = x.shape[0]
        flops = 2 * bsz * (FLAT * D_LAT + (D_LAT + D_COND) * D_HID + D_HID * FLAT)
        y = _call(_enc_dec_kernel, (bsz, FLAT), flops, 2 * bsz * D_HID,
                  x, c, params["enc_w"], params["enc_b"],
                  params["dec_w1c"], params["dec_b1"],
                  params["dec_w2"], params["dec_b2"])
        return y.reshape(bsz, *IMG_SIZE)            # back to NCHW

    elif behaviour == "enc":
        # latent = encode(img); dim_up_mlp(latent)  -- one fused kernel
        x = img.reshape(img.shape[0], -1).astype(jnp.float32)
        bsz = x.shape[0]
        flops = 2 * bsz * (FLAT * D_LAT + D_LAT * LANE)
        y = _call(_enc_up_kernel, (bsz, LANE), flops, 0,
                  x, params["enc_w"], params["enc_b"],
                  params["up_w"], params["up_b"])
        return y[:, :D_UP]                          # drop lane padding

    elif behaviour == "dec":
        assert latent is not None
        bsz = latent.shape[0]
        zc = jnp.concatenate([latent.astype(jnp.float32), c], axis=-1)  # (B, 64)
        flops = 2 * bsz * ((D_LAT + D_COND) * D_HID + D_HID * FLAT)
        y = _call(_cond_mlp_kernel, (bsz, FLAT), flops, 2 * bsz * D_HID,
                  zc, params["dec_w1c"], params["dec_b1"],
                  params["dec_w2"], params["dec_b2"])
        return y.reshape(bsz, *IMG_SIZE)

    elif behaviour == "denoise":
        assert latent is not None
        x_t, t = args                               # denoise_model(*args)
        bsz = x_t.shape[0]
        t_col = t.astype(jnp.float32).reshape(bsz, 1)
        flops = 2 * bsz * ((D_LAT + D_TEMB + D_COND) * D_HID + D_HID * LANE)
        trans = 2 * bsz * D_HID + 3 * bsz * (D_TEMB // 2)   # sigmoid + temb
        y = _call(_denoise_kernel, (bsz, LANE), flops, trans,
                  x_t.astype(jnp.float32), t_col, c,
                  params["den_w1"], params["den_b1"],
                  params["den_w2"], params["den_b2"])
        return y[:, :D_LAT]                         # drop lane padding

    else:
        raise ValueError(f"unknown behaviour {behaviour!r}")


# ----------------------- fused multi-step sampling driver --------------------
def diffusion_sample(params, x_init, c, t_steps, coef_a, coef_b):
    """Run `num_steps` denoise steps inside ONE pallas_call.

    Weights stay VMEM-resident across the whole grid (constant index_maps),
    the latent is carried in VMEM scratch, the timestep table is scalar
    prefetched and the schedule coefficients are read from SMEM.
    """
    bsz = x_init.shape[0]
    num_steps = int(t_steps.shape[0])
    x_init = x_init.astype(jnp.float32)
    c = c.astype(jnp.float32)

    weights = (params["den_w1"], params["den_b1"],
               params["den_w2"], params["den_b2"])
    flops = 2 * bsz * num_steps * ((D_LAT + D_TEMB + D_COND) * D_HID
                                   + D_HID * LANE)
    trans = num_steps * (2 * bsz * D_HID + 3 * (D_TEMB // 2))
    ce = pl.CostEstimate(
        flops=int(flops), transcendentals=int(trans),
        bytes_accessed=_bytes_accessed(
            (t_steps, coef_a, coef_b, x_init, c) + weights, (bsz, D_LAT)))

    cmap = lambda s, t: (0, 0)   # constant block index -> VMEM-resident operand
    grid_spec = pltpu.PrefetchScalarGridSpec(
        num_scalar_prefetch=1,                    # t_steps -> SMEM
        grid=(num_steps,),
        in_specs=[
            pl.BlockSpec(memory_space=pltpu.MemorySpace.SMEM),   # coef_a
            pl.BlockSpec(memory_space=pltpu.MemorySpace.SMEM),   # coef_b
            pl.BlockSpec((bsz, D_LAT), cmap),                    # x_init
            pl.BlockSpec((bsz, D_COND), cmap),                   # c
            pl.BlockSpec((D_LAT + D_TEMB + D_COND, D_HID), cmap),  # den_w1
            pl.BlockSpec((1, D_HID), cmap),                      # den_b1
            pl.BlockSpec((D_HID, LANE), cmap),                   # den_w2
            pl.BlockSpec((1, LANE), cmap),                       # den_b2
        ],
        out_specs=pl.BlockSpec((bsz, D_LAT), cmap),
        scratch_shapes=[pltpu.VMEM((bsz, D_LAT), jnp.float32)],
    )
    return pl.pallas_call(
        _sampler_kernel,
        out_shape=jax.ShapeDtypeStruct((bsz, D_LAT), jnp.float32),
        grid_spec=grid_spec,
        compiler_params=pltpu.CompilerParams(
            dimension_semantics=("arbitrary",)),   # sequential diffusion steps
        cost_estimate=ce,
    )(t_steps, coef_a, coef_b, x_init, c, *weights)


# ----------------------------- demo ------------------------------------------
if __name__ == "__main__":
    key = jax.random.PRNGKey(0)
    k_img, k_c, k_par, k_lat, k_noise, k_t = jax.random.split(key, 6)

    img = jax.random.normal(k_img, (B, C, H, W), jnp.float32)   # NCHW
    c = jax.random.normal(k_c, (B, D_COND), jnp.float32)
    params = init_params(k_par)

    # enc_dec
    pred = ae_with_diffusion_forward(params, img, c, "enc_dec")
    assert pred.shape == (B, C, H, W)

    # enc (with dim_up_mlp)
    lat_up = ae_with_diffusion_forward(params, img, c, "enc")
    assert lat_up.shape == (B, D_UP)

    # dec (latent supplied externally, as in the original module)
    latent = jax.random.normal(k_lat, (B, D_LAT), jnp.float32)
    dec_out = ae_with_diffusion_forward(params, img, c, "dec", latent)
    assert dec_out.shape == (B, C, H, W)

    # denoise (x_t, t passed positionally after latent -> bound to *args)
    x_t = latent + 0.1 * jax.random.normal(k_noise, latent.shape, jnp.float32)
    t = jax.random.randint(k_t, (B,), 0, 1000)
    eps = ae_with_diffusion_forward(params, img, c, "denoise", latent, x_t, t)
    assert eps.shape == (B, D_LAT)

    # fused multi-step sampler: whole reverse chain in ONE pallas_call
    num_steps = 8
    t_steps = (jnp.arange(num_steps - 1, -1, -1, dtype=jnp.int32)
               * (1000 // num_steps))
    coef_a = jnp.full((num_steps,), 0.98, jnp.float32)
    coef_b = jnp.full((num_steps,), -0.05, jnp.float32)
    x0 = diffusion_sample(params, x_t, c, t_steps, coef_a, coef_b)
    assert x0.shape == (B, D_LAT)

    jax.block_until_ready((pred, lat_up, dec_out, eps, x0))
    print("KERNEL_OK")
</pallas_src>

<mosaic_0001>
module attributes {stable_mosaic.version = 11 : i64} {
  func.func @_enc_dec_kernel(%arg0: memref<2x1024xf32, #tpu.memory_space<vmem>>, %arg1: memref<2x32xf32, #tpu.memory_space<vmem>>, %arg2: memref<1024x32xbf16, #tpu.memory_space<vmem>>, %arg3: memref<1x32xf32, #tpu.memory_space<vmem>>, %arg4: memref<64x256xbf16, #tpu.memory_space<vmem>>, %arg5: memref<1x256xf32, #tpu.memory_space<vmem>>, %arg6: memref<256x1024xbf16, #tpu.memory_space<vmem>>, %arg7: memref<1x1024xf32, #tpu.memory_space<vmem>>, %arg8: memref<2x1024xf32, #tpu.memory_space<vmem>>) attributes {dimension_semantics = [], scalar_prefetch = 0 : i64, scratch_operands = 0 : i64, tpu.core_type = #tpu.core_type<tc>} {
    %c0 = arith.constant 0 : index
    %c0_0 = arith.constant 0 : index
    %0 = vector.load %arg0[%c0, %c0_0] : memref<2x1024xf32, #tpu.memory_space<vmem>>, vector<2x1024xf32>
    %1 = arith.truncf %0 : vector<2x1024xf32> to vector<2x1024xbf16>
    %c0_1 = arith.constant 0 : index
    %c0_2 = arith.constant 0 : index
    %2 = vector.load %arg2[%c0_1, %c0_2] : memref<1024x32xbf16, #tpu.memory_space<vmem>>, vector<1024x32xbf16>
    %cst = arith.constant dense<0.000000e+00> : vector<2x32xf32>
    %3 = tpu.matmul %1, %2, %cst {dimension_numbers = #tpu.dot_dimension_numbers<[1], [0], [0], [1], [0, 0, 1, 1], [], []>} : vector<2x1024xbf16>, vector<1024x32xbf16>, vector<2x32xf32> -> vector<2x32xf32>
    %c0_3 = arith.constant 0 : index
    %c0_4 = arith.constant 0 : index
    %4 = vector.load %arg3[%c0_3, %c0_4] : memref<1x32xf32, #tpu.memory_space<vmem>>, vector<1x32xf32>
    %5 = vector.broadcast %4 : vector<1x32xf32> to vector<2x32xf32>
    %6 = arith.addf %3, %5 : vector<2x32xf32>
    %c0_5 = arith.constant 0 : index
    %c0_6 = arith.constant 0 : index
    %7 = vector.load %arg1[%c0_5, %c0_6] : memref<2x32xf32, #tpu.memory_space<vmem>>, vector<2x32xf32>
    %8 = tpu.concatenate %6, %7 in 1 : vector<2x32xf32>, vector<2x32xf32> -> vector<2x64xf32>
    %9 = arith.truncf %8 : vector<2x64xf32> to vector<2x64xbf16>
    %c0_7 = arith.constant 0 : index
    %c0_8 = arith.constant 0 : index
    %10 = vector.load %arg4[%c0_7, %c0_8] : memref<64x256xbf16, #tpu.memory_space<vmem>>, vector<64x256xbf16>
    %cst_9 = arith.constant dense<0.000000e+00> : vector<2x256xf32>
    %11 = tpu.matmul %9, %10, %cst_9 {dimension_numbers = #tpu.dot_dimension_numbers<[1], [0], [0], [1], [0, 0, 1, 1], [], []>} : vector<2x64xbf16>, vector<64x256xbf16>, vector<2x256xf32> -> vector<2x256xf32>
    %c0_10 = arith.constant 0 : index
    %c0_11 = arith.constant 0 : index
    %12 = vector.load %arg5[%c0_10, %c0_11] : memref<1x256xf32, #tpu.memory_space<vmem>>, vector<1x256xf32>
    %13 = vector.broadcast %12 : vector<1x256xf32> to vector<2x256xf32>
    %14 = arith.addf %11, %13 : vector<2x256xf32>
    %15 = arith.negf %14 : vector<2x256xf32>
    %16 = math.exp %15 : vector<2x256xf32>
    %cst_12 = arith.constant 1.000000e+00 : f32
    %17 = vector.broadcast %cst_12 : f32 to vector<2x256xf32>
    %18 = arith.addf %17, %16 : vector<2x256xf32>
    %19 = arith.divf %17, %18 : vector<2x256xf32>
    %20 = arith.mulf %14, %19 : vector<2x256xf32>
    %21 = arith.truncf %20 : vector<2x256xf32> to vector<2x256xbf16>
    %c0_13 = arith.constant 0 : index
    %c0_14 = arith.constant 0 : index
    %22 = vector.load %arg6[%c0_13, %c0_14] : memref<256x1024xbf16, #tpu.memory_space<vmem>>, vector<256x1024xbf16>
    %cst_15 = arith.constant dense<0.000000e+00> : vector<2x1024xf32>
    %23 = tpu.matmul %21, %22, %cst_15 {dimension_numbers = #tpu.dot_dimension_numbers<[1], [0], [0], [1], [0, 0, 1, 1], [], []>} : vector<2x256xbf16>, vector<256x1024xbf16>, vector<2x1024xf32> -> vector<2x1024xf32>
    %c0_16 = arith.constant 0 : index
    %c0_17 = arith.constant 0 : index
    %24 = vector.load %arg7[%c0_16, %c0_17] : memref<1x1024xf32, #tpu.memory_space<vmem>>, vector<1x1024xf32>
    %25 = vector.broadcast %24 : vector<1x1024xf32> to vector<2x1024xf32>
    %26 = arith.addf %23, %25 : vector<2x1024xf32>
    %c0_18 = arith.constant 0 : index
    %c0_19 = arith.constant 0 : index
    %27 = vector.load %arg8[%c0_18, %c0_19] : memref<2x1024xf32, #tpu.memory_space<vmem>>, vector<2x1024xf32>
    tpu.vector_store %arg8[%c0_18, %c0_19], %26 {strides = array<i32>} : memref<2x1024xf32, #tpu.memory_space<vmem>>, vector<2x1024xf32>,
    return
  }
}

</mosaic_0001>

<llo_original>
// kernel: tpu_custom_call.1
$region0: #{tpu_custom_call.1}
  #allocation0 [shape = 'u32[]', space=smem, size = 0x4, offset = 0x4, fixed_abs, tag = 'smem constant byte address 0x4 - core index']
  #allocation1 [shape = 'u32[144,128]{1,0:T(1,128)}', space=vmem, size = 0x12000, scoped, tag = 'internal scratch']
  %s0 = inlined_call_operand.vmem [shape: f32[2,1024], index: 0, kind: input, shape index: {}]
  %s1 = inlined_call_operand.vmem [shape: f32[2,32], index: 1, kind: input, shape index: {}]
  %s2 = inlined_call_operand.vmem [shape: bf16[1024,32], index: 2, kind: input, shape index: {}]
  %s3 = inlined_call_operand.vmem [shape: f32[1,32], index: 3, kind: input, shape index: {}]
  %s4 = inlined_call_operand.vmem [shape: bf16[64,256], index: 4, kind: input, shape index: {}]
  %s5 = inlined_call_operand.vmem [shape: f32[1,256], index: 5, kind: input, shape index: {}]
  %s6 = inlined_call_operand.hbm [shape: bf16[256,1024], index: 6, kind: input, shape index: {}]
  %s7 = inlined_call_operand.vmem [shape: f32[1,1024], index: 7, kind: input, shape index: {}]
  %s8 = inlined_call_operand.hbm [shape: f32[2,1024], index: 8, kind: output, shape index: {}]
  %s9 = sld [smem:[#allocation0]]
  $region46: #{tpu_custom_call.1} parent=0
    _
  %s11 = ssub.s32 1, %s9
  %s12 = scalar_select 0, %s11, %s9
  $region1: #{tpu_custom_call.1} parent=0
    #allocation2 [shape = 'u8[524288]{0}', space=vmem, size = 0x80000, scoped, tag = 'input window, operand 6, single buffered']
    #allocation3 [shape = 's32[1]{0}', space=sflag, size = 0x4, scoped, tag = 'scoped memory for tpu_custom_call.1']
    #allocation4 [shape = 's32[1]{0}', space=sflag, size = 0x4, scoped, tag = 'scoped memory for tpu_custom_call.1']
    #allocation5 [shape = 'u8[8192]{0}', space=vmem, size = 0x2000, scoped, tag = 'output window, operand 0, single buffered']
    %13 = vsyncpa [#allocation3], 0
    %14 = vsyncpa [#allocation4], 0
    // Predicated region
    $region2: #{tpu_custom_call.1} parent=1 // pred_check
      _
    $region3: #{tpu_custom_call.1} parent=1 // pred_check_branch
      %16 = sbr.rel (0) target = $region5
    $region4: #{tpu_custom_call.1} parent=1 // pred_region
      _
    $region5: #{tpu_custom_call.1} parent=1 // pred_fallthru
      _
    // Predicated region
    $region6: #{tpu_custom_call.1} parent=1 // pred_check
      _
    $region7: #{tpu_custom_call.1} parent=1 // pred_check_branch
      %18 = sbr.rel (0) target = $region9
    $region8: #{tpu_custom_call.1} parent=1 // pred_region
      _
    $region9: #{tpu_custom_call.1} parent=1 // pred_fallthru
      _
    // Predicated region
    $region10: #{tpu_custom_call.1} parent=1 // pred_check
      _
    $region11: #{tpu_custom_call.1} parent=1 // pred_check_branch
      %20 = sbr.rel (0) target = $region13
    $region12: #{tpu_custom_call.1} parent=1 // pred_region
      _
    $region13: #{tpu_custom_call.1} parent=1 // pred_fallthru
      _
    // Predicated region
    $region14: #{tpu_custom_call.1} parent=1 // pred_check
      _
    $region15: #{tpu_custom_call.1} parent=1 // pred_check_branch
      %22 = sbr.rel (0) target = $region17
    $region16: #{tpu_custom_call.1} parent=1 // pred_region
      _
    $region17: #{tpu_custom_call.1} parent=1 // pred_fallthru
      _
    // Predicated region
    $region18: #{tpu_custom_call.1} parent=1 // pred_check
      _
    $region19: #{tpu_custom_call.1} parent=1 // pred_check_branch
      %24 = sbr.rel (0) target = $region21
    $region20: #{tpu_custom_call.1} parent=1 // pred_region
      _
    $region21: #{tpu_custom_call.1} parent=1 // pred_fallthru
      _
    // Predicated region
    $region22: #{tpu_custom_call.1} parent=1 // pred_check
      _
    $region23: #{tpu_custom_call.1} parent=1 // pred_check_branch
      %26 = sbr.rel (0) target = $region25
    $region24: #{tpu_custom_call.1} parent=1 // pred_region
      _
    $region25: #{tpu_custom_call.1} parent=1 // pred_fallthru
      _
    // Predicated region
    $region26: #{tpu_custom_call.1} parent=1 // pred_check
      _
    $region27: #{tpu_custom_call.1} parent=1 // pred_check_branch
      %28 = sbr.rel (0) target = $region29
    $region28: #{tpu_custom_call.1} parent=1 // pred_region
      %s30 = ssub.s32 16384, 16384
      %31 = vsyncadd [#allocation3], %s30
      %s32 = sshll.u32 [#allocation2], 4
      %s33 = int_to_ptr.vmem [resolvable:$true] %s32
      %38 = dma.hbm_to_vmem [thread:$0]  %s6, 16384, %s33, [#allocation3], 512, 512, 32
    $region29: #{tpu_custom_call.1} parent=1 // pred_fallthru
      _
    // Predicated region
    $region30: #{tpu_custom_call.1} parent=1 // pred_check
      _
    $region31: #{tpu_custom_call.1} parent=1 // pred_check_branch
      %40 = sbr.rel (0) target = $region33
    $region32: #{tpu_custom_call.1} parent=1 // pred_region
      _
    $region33: #{tpu_custom_call.1} parent=1 // pred_fallthru
      _
    // Predicated region
    $region34: #{tpu_custom_call.1} parent=1 // pred_check
      _
    $region35: #{tpu_custom_call.1} parent=1 // pred_check_branch
      %42 = sbr.rel (0) target = $region37
    $region36: #{tpu_custom_call.1} parent=1 // pred_region
      %43 = dma.done [#allocation3], 16384
    $region37: #{tpu_custom_call.1} parent=1 // pred_fallthru
      _
    %v45 = vld [vmem:[%s0] sm:$0xff]
    %v46 = vld [vmem:[%s0 + $0x8] sm:$0xff]
    %v49 = vcombine.high %v45, %v45
    %v51 = vunpack.c.l.s4 1983009808
    %v52 = vunpack.c.0.s8 %v51
    %v53 = vlaneseq
    %v54 = vshrl.u32 %v53, 7
    %v55 = vsub.s32 %v52, %v54
    %v56 = vrot.slane %v45, %v55
    %v58 = vunpack.c.l.s4 1983009808
    %v59 = vunpack.c.0.s8 %v58
    %v60 = vlaneseq
    %v61 = vshrl.u32 %v60, 7
    %v62 = vsub.s32 %v59, %v61
    %v63 = vrot.slane %v49, %v62
    %v64 = vcombine.high %v56, %v56
    %v65 = vcombine.high %v63, %v63
    %v66 = vcombine.high %v46, %v46
    %v68 = vunpack.c.l.s4 1983009808
    %v69 = vunpack.c.0.s8 %v68
    %v70 = vlaneseq
    %v71 = vshrl.u32 %v70, 7
    %v72 = vsub.s32 %v69, %v71
    %v73 = vrot.slane %v46, %v72
    %v75 = vunpack.c.l.s4 1983009808
    %v76 = vunpack.c.0.s8 %v75
    %v77 = vlaneseq
    %v78 = vshrl.u32 %v77, 7
    %v79 = vsub.s32 %v76, %v78
    %v80 = vrot.slane %v66, %v79
    %v81 = vcombine.high %v73, %v73
    %v82 = vcombine.high %v80, %v80
    %v91 = vpack.c.bf16 %v56, %v56
    %v92 = vpack.c.bf16 %v64, %v64
    %v93 = vpack.c.bf16 %v63, %v63
    %v94 = vpack.c.bf16 %v65, %v65
    %v95 = vpack.c.bf16 %v73, %v73
    %v96 = vpack.c.bf16 %v81, %v81
    %v97 = vpack.c.bf16 %v80, %v80
    %v98 = vpack.c.bf16 %v82, %v82
    %v99 = vld [vmem:[%s2] sm:$0xf]
    %v100 = vld [vmem:[%s2 + $0x4] sm:$0xf]
    %v101 = vld [vmem:[%s2 + $0x8] sm:$0xf]
    %v102 = vld [vmem:[%s2 + $0xc] sm:$0xf]
    %v103 = vld [vmem:[%s2 + $0x10] sm:$0xf]
    %v104 = vld [vmem:[%s2 + $0x14] sm:$0xf]
    %v105 = vld [vmem:[%s2 + $0x18] sm:$0xf]
    %v106 = vld [vmem:[%s2 + $0x1c] sm:$0xf]
    %v107 = vld [vmem:[%s2 + $0x20] sm:$0xf]
    %v108 = vld [vmem:[%s2 + $0x24] sm:$0xf]
    %v109 = vld [vmem:[%s2 + $0x28] sm:$0xf]
    %v110 = vld [vmem:[%s2 + $0x2c] sm:$0xf]
    %v111 = vld [vmem:[%s2 + $0x30] sm:$0xf]
    %v112 = vld [vmem:[%s2 + $0x34] sm:$0xf]
    %v113 = vld [vmem:[%s2 + $0x38] sm:$0xf]
    %v114 = vld [vmem:[%s2 + $0x3c] sm:$0xf]
    %v115 = vld [vmem:[%s2 + $0x40] sm:$0xf]
    %v116 = vld [vmem:[%s2 + $0x44] sm:$0xf]
    %v117 = vld [vmem:[%s2 + $0x48] sm:$0xf]
    %v118 = vld [vmem:[%s2 + $0x4c] sm:$0xf]
    %v119 = vld [vmem:[%s2 + $0x50] sm:$0xf]
    %v120 = vld [vmem:[%s2 + $0x54] sm:$0xf]
    %v121 = vld [vmem:[%s2 + $0x58] sm:$0xf]
    %v122 = vld [vmem:[%s2 + $0x5c] sm:$0xf]
    %v123 = vld [vmem:[%s2 + $0x60] sm:$0xf]
    %v124 = vld [vmem:[%s2 + $0x64] sm:$0xf]
    %v125 = vld [vmem:[%s2 + $0x68] sm:$0xf]
    %v126 = vld [vmem:[%s2 + $0x6c] sm:$0xf]
    %v127 = vld [vmem:[%s2 + $0x70] sm:$0xf]
    %v128 = vld [vmem:[%s2 + $0x74] sm:$0xf]
    %v129 = vld [vmem:[%s2 + $0x78] sm:$0xf]
    %v130 = vld [vmem:[%s2 + $0x7c] sm:$0xf]
    %v131 = vld [vmem:[%s2 + $0x80] sm:$0xf]
    %v132 = vld [vmem:[%s2 + $0x84] sm:$0xf]
    %v133 = vld [vmem:[%s2 + $0x88] sm:$0xf]
    %v134 = vld [vmem:[%s2 + $0x8c] sm:$0xf]
    %v135 = vld [vmem:[%s2 + $0x90] sm:$0xf]
    %v136 = vld [vmem:[%s2 + $0x94] sm:$0xf]
    %v137 = vld [vmem:[%s2 + $0x98] sm:$0xf]
    %v138 = vld [vmem:[%s2 + $0x9c] sm:$0xf]
    %v139 = vld [vmem:[%s2 + $0xa0] sm:$0xf]
    %v140 = vld [vmem:[%s2 + $0xa4] sm:$0xf]
    %v141 = vld [vmem:[%s2 + $0xa8] sm:$0xf]
    %v142 = vld [vmem:[%s2 + $0xac] sm:$0xf]
    %v143 = vld [vmem:[%s2 + $0xb0] sm:$0xf]
    %v144 = vld [vmem:[%s2 + $0xb4] sm:$0xf]
    %v145 = vld [vmem:[%s2 + $0xb8] sm:$0xf]
    %v146 = vld [vmem:[%s2 + $0xbc] sm:$0xf]
    %v147 = vld [vmem:[%s2 + $0xc0] sm:$0xf]
    %v148 = vld [vmem:[%s2 + $0xc4] sm:$0xf]
    %v149 = vld [vmem:[%s2 + $0xc8] sm:$0xf]
    %v150 = vld [vmem:[%s2 + $0xcc] sm:$0xf]
    %v151 = vld [vmem:[%s2 + $0xd0] sm:$0xf]
    %v152 = vld [vmem:[%s2 + $0xd4] sm:$0xf]
    %v153 = vld [vmem:[%s2 + $0xd8] sm:$0xf]
    %v154 = vld [vmem:[%s2 + $0xdc] sm:$0xf]
    %v155 = vld [vmem:[%s2 + $0xe0] sm:$0xf]
    %v156 = vld [vmem:[%s2 + $0xe4] sm:$0xf]
    %v157 = vld [vmem:[%s2 + $0xe8] sm:$0xf]
    %v158 = vld [vmem:[%s2 + $0xec] sm:$0xf]
    %v159 = vld [vmem:[%s2 + $0xf0] sm:$0xf]
    %v160 = vld [vmem:[%s2 + $0xf4] sm:$0xf]
    %v161 = vld [vmem:[%s2 + $0xf8] sm:$0xf]
    %v162 = vld [vmem:[%s2 + $0xfc] sm:$0xf]
    %v163 = vld [vmem:[%s2 + $0x100] sm:$0xf]
    %v164 = vld [vmem:[%s2 + $0x104] sm:$0xf]
    %v165 = vld [vmem:[%s2 + $0x108] sm:$0xf]
    %v166 = vld [vmem:[%s2 + $0x10c] sm:$0xf]
    %v167 = vld [vmem:[%s2 + $0x110] sm:$0xf]
    %v168 = vld [vmem:[%s2 + $0x114] sm:$0xf]
    %v169 = vld [vmem:[%s2 + $0x118] sm:$0xf]
    %v170 = vld [vmem:[%s2 + $0x11c] sm:$0xf]
    %v171 = vld [vmem:[%s2 + $0x120] sm:$0xf]
    %v172 = vld [vmem:[%s2 + $0x124] sm:$0xf]
    %v173 = vld [vmem:[%s2 + $0x128] sm:$0xf]
    %v174 = vld [vmem:[%s2 + $0x12c] sm:$0xf]
    %v175 = vld [vmem:[%s2 + $0x130] sm:$0xf]
    %v176 = vld [vmem:[%s2 + $0x134] sm:$0xf]
    %v177 = vld [vmem:[%s2 + $0x138] sm:$0xf]
    %v178 = vld [vmem:[%s2 + $0x13c] sm:$0xf]
    %v179 = vld [vmem:[%s2 + $0x140] sm:$0xf]
    %v180 = vld [vmem:[%s2 + $0x144] sm:$0xf]
    %v181 = vld [vmem:[%s2 + $0x148] sm:$0xf]
    %v182 = vld [vmem:[%s2 + $0x14c] sm:$0xf]
    %v183 = vld [vmem:[%s2 + $0x150] sm:$0xf]
    %v184 = vld [vmem:[%s2 + $0x154] sm:$0xf]
    %v185 = vld [vmem:[%s2 + $0x158] sm:$0xf]
    %v186 = vld [vmem:[%s2 + $0x15c] sm:$0xf]
    %v187 = vld [vmem:[%s2 + $0x160] sm:$0xf]
    %v188 = vld [vmem:[%s2 + $0x164] sm:$0xf]
    %v189 = vld [vmem:[%s2 + $0x168] sm:$0xf]
    %v190 = vld [vmem:[%s2 + $0x16c] sm:$0xf]
    %v191 = vld [vmem:[%s2 + $0x170] sm:$0xf]
    %v192 = vld [vmem:[%s2 + $0x174] sm:$0xf]
    %v193 = vld [vmem:[%s2 + $0x178] sm:$0xf]
    %v194 = vld [vmem:[%s2 + $0x17c] sm:$0xf]
    %v195 = vld [vmem:[%s2 + $0x180] sm:$0xf]
    %v196 = vld [vmem:[%s2 + $0x184] sm:$0xf]
    %v197 = vld [vmem:[%s2 + $0x188] sm:$0xf]
    %v198 = vld [vmem:[%s2 + $0x18c] sm:$0xf]
    %v199 = vld [vmem:[%s2 + $0x190] sm:$0xf]
    %v200 = vld [vmem:[%s2 + $0x194] sm:$0xf]
    %v201 = vld [vmem:[%s2 + $0x198] sm:$0xf]
    %v202 = vld [vmem:[%s2 + $0x19c] sm:$0xf]
    %v203 = vld [vmem:[%s2 + $0x1a0] sm:$0xf]
    %v204 = vld [vmem:[%s2 + $0x1a4] sm:$0xf]
    %v205 = vld [vmem:[%s2 + $0x1a8] sm:$0xf]
    %v206 = vld [vmem:[%s2 + $0x1ac] sm:$0xf]
    %v207 = vld [vmem:[%s2 + $0x1b0] sm:$0xf]
    %v208 = vld [vmem:[%s2 + $0x1b4] sm:$0xf]
    %v209 = vld [vmem:[%s2 + $0x1b8] sm:$0xf]
    %v210 = vld [vmem:[%s2 + $0x1bc] sm:$0xf]
    %v211 = vld [vmem:[%s2 + $0x1c0] sm:$0xf]
    %v212 = vld [vmem:[%s2 + $0x1c4] sm:$0xf]
    %v213 = vld [vmem:[%s2 + $0x1c8] sm:$0xf]
    %v214 = vld [vmem:[%s2 + $0x1cc] sm:$0xf]
    %v215 = vld [vmem:[%s2 + $0x1d0] sm:$0xf]
    %v216 = vld [vmem:[%s2 + $0x1d4] sm:$0xf]
    %v217 = vld [vmem:[%s2 + $0x1d8] sm:$0xf]
    %v218 = vld [vmem:[%s2 + $0x1dc] sm:$0xf]
    %v219 = vld [vmem:[%s2 + $0x1e0] sm:$0xf]
    %v220 = vld [vmem:[%s2 + $0x1e4] sm:$0xf]
    %v221 = vld [vmem:[%s2 + $0x1e8] sm:$0xf]
    %v222 = vld [vmem:[%s2 + $0x1ec] sm:$0xf]
    %v223 = vld [vmem:[%s2 + $0x1f0] sm:$0xf]
    %v224 = vld [vmem:[%s2 + $0x1f4] sm:$0xf]
    %v225 = vld [vmem:[%s2 + $0x1f8] sm:$0xf]
    %v226 = vld [vmem:[%s2 + $0x1fc] sm:$0xf]
    %v227 = vld [vmem:[%s3] sm:$0x1]
    %v229 = vlaneseq
    %v230 = vshrl.u32 %v229, 7
    %v231 = vsub.s32 0, %v230
    %v232 = vrot.slane %v227, %v231
    %v362 = vunpack.c.l.b16 %v99
    %v363 = vunpack.c.l.b16 %v100
    %v364 = vunpack.c.l.b16 %v101
    %v365 = vunpack.c.l.b16 %v102
    %v366 = vunpack.c.l.b16 %v103
    %v367 = vunpack.c.l.b16 %v104
    %v368 = vunpack.c.l.b16 %v105
    %v369 = vunpack.c.l.b16 %v106
    %v370 = vunpack.c.l.b16 %v107
    %v371 = vunpack.c.l.b16 %v108
    %v372 = vunpack.c.l.b16 %v109
    %v373 = vunpack.c.l.b16 %v110
    %v374 = vunpack.c.l.b16 %v111
    %v375 = vunpack.c.l.b16 %v112
    %v376 = vunpack.c.l.b16 %v113
    %v377 = vunpack.c.l.b16 %v114
    %v378 = vunpack.c.l.b16 %v115
    %v379 = vunpack.c.l.b16 %v116
    %v380 = vunpack.c.l.b16 %v117
    %v381 = vunpack.c.l.b16 %v118
    %v382 = vunpack.c.l.b16 %v119
    %v383 = vunpack.c.l.b16 %v120
    %v384 = vunpack.c.l.b16 %v121
    %v385 = vunpack.c.l.b16 %v122
    %v386 = vunpack.c.l.b16 %v123
    %v387 = vunpack.c.l.b16 %v124
    %v388 = vunpack.c.l.b16 %v125
    %v389 = vunpack.c.l.b16 %v126
    %v390 = vunpack.c.l.b16 %v127
    %v391 = vunpack.c.l.b16 %v128
    %v392 = vunpack.c.l.b16 %v129
    %v393 = vunpack.c.l.b16 %v130
    %v394 = vunpack.c.l.b16 %v131
    %v395 = vunpack.c.l.b16 %v132
    %v396 = vunpack.c.l.b16 %v133
    %v397 = vunpack.c.l.b16 %v134
    %v398 = vunpack.c.l.b16 %v135
    %v399 = vunpack.c.l.b16 %v136
    %v400 = vunpack.c.l.b16 %v137
    %v401 = vunpack.c.l.b16 %v138
    %v402 = vunpack.c.l.b16 %v139
    %v403 = vunpack.c.l.b16 %v140
    %v404 = vunpack.c.l.b16 %v141
    %v405 = vunpack.c.l.b16 %v142
    %v406 = vunpack.c.l.b16 %v143
    %v407 = vunpack.c.l.b16 %v144
    %v408 = vunpack.c.l.b16 %v145
    %v409 = vunpack.c.l.b16 %v146
    %v410 = vunpack.c.l.b16 %v147
    %v411 = vunpack.c.l.b16 %v148
    %v412 = vunpack.c.l.b16 %v149
    %v413 = vunpack.c.l.b16 %v150
    %v414 = vunpack.c.l.b16 %v151
    %v415 = vunpack.c.l.b16 %v152
    %v416 = vunpack.c.l.b16 %v153
    %v417 = vunpack.c.l.b16 %v154
    %v418 = vunpack.c.l.b16 %v155
    %v419 = vunpack.c.l.b16 %v156
    %v420 = vunpack.c.l.b16 %v157
    %v421 = vunpack.c.l.b16 %v158
    %v422 = vunpack.c.l.b16 %v159
    %v423 = vunpack.c.l.b16 %v160
    %v424 = vunpack.c.l.b16 %v161
    %v425 = vunpack.c.l.b16 %v162
    %v426 = vunpack.c.l.b16 %v163
    %v427 = vunpack.c.l.b16 %v164
    %v428 = vunpack.c.l.b16 %v165
    %v429 = vunpack.c.l.b16 %v166
    %v430 = vunpack.c.l.b16 %v167
    %v431 = vunpack.c.l.b16 %v168
    %v432 = vunpack.c.l.b16 %v169
    %v433 = vunpack.c.l.b16 %v170
    %v434 = vunpack.c.l.b16 %v171
    %v435 = vunpack.c.l.b16 %v172
    %v436 = vunpack.c.l.b16 %v173
    %v437 = vunpack.c.l.b16 %v174
    %v438 = vunpack.c.l.b16 %v175
    %v439 = vunpack.c.l.b16 %v176
    %v440 = vunpack.c.l.b16 %v177
    %v441 = vunpack.c.l.b16 %v178
    %v442 = vunpack.c.l.b16 %v179
    %v443 = vunpack.c.l.b16 %v180
    %v444 = vunpack.c.l.b16 %v181
    %v445 = vunpack.c.l.b16 %v182
    %v446 = vunpack.c.l.b16 %v183
    %v447 = vunpack.c.l.b16 %v184
    %v448 = vunpack.c.l.b16 %v185
    %v449 = vunpack.c.l.b16 %v186
    %v450 = vunpack.c.l.b16 %v187
    %v451 = vunpack.c.l.b16 %v188
    %v452 = vunpack.c.l.b16 %v189
    %v453 = vunpack.c.l.b16 %v190
    %v454 = vunpack.c.l.b16 %v191
    %v455 = vunpack.c.l.b16 %v192
    %v456 = vunpack.c.l.b16 %v193
    %v457 = vunpack.c.l.b16 %v194
    %v458 = vunpack.c.l.b16 %v195
    %v459 = vunpack.c.l.b16 %v196
    %v460 = vunpack.c.l.b16 %v197
    %v461 = vunpack.c.l.b16 %v198
    %v462 = vunpack.c.l.b16 %v199
    %v463 = vunpack.c.l.b16 %v200
    %v464 = vunpack.c.l.b16 %v201
    %v465 = vunpack.c.l.b16 %v202
    %v466 = vunpack.c.l.b16 %v203
    %v467 = vunpack.c.l.b16 %v204
    %v468 = vunpack.c.l.b16 %v205
    %v469 = vunpack.c.l.b16 %v206
    %v470 = vunpack.c.l.b16 %v207
    %v471 = vunpack.c.l.b16 %v208
    %v472 = vunpack.c.l.b16 %v209
    %v473 = vunpack.c.l.b16 %v210
    %v474 = vunpack.c.l.b16 %v211
    %v475 = vunpack.c.l.b16 %v212
    %v476 = vunpack.c.l.b16 %v213
    %v477 = vunpack.c.l.b16 %v214
    %v478 = vunpack.c.l.b16 %v215
    %v479 = vunpack.c.l.b16 %v216
    %v480 = vunpack.c.l.b16 %v217
    %v481 = vunpack.c.l.b16 %v218
    %v482 = vunpack.c.l.b16 %v219
    %v483 = vunpack.c.l.b16 %v220
    %v484 = vunpack.c.l.b16 %v221
    %v485 = vunpack.c.l.b16 %v222
    %v486 = vunpack.c.l.b16 %v223
    %v487 = vunpack.c.l.b16 %v224
    %v488 = vunpack.c.l.b16 %v225
    %v489 = vunpack.c.l.b16 %v226
    %v490 = vpack.c.b16 %v363, %v362
    %v491 = vpack.c.b16 %v365, %v364
    %v492 = vpack.c.b16 %v367, %v366
    %v493 = vpack.c.b16 %v369, %v368
    %v494 = vpack.c.b16 %v371, %v370
    %v495 = vpack.c.b16 %v373, %v372
    %v496 = vpack.c.b16 %v375, %v374
    %v497 = vpack.c.b16 %v377, %v376
    %v498 = vpack.c.b16 %v379, %v378
    %v499 = vpack.c.b16 %v381, %v380
    %v500 = vpack.c.b16 %v383, %v382
    %v501 = vpack.c.b16 %v385, %v384
    %v502 = vpack.c.b16 %v387, %v386
    %v503 = vpack.c.b16 %v389, %v388
    %v504 = vpack.c.b16 %v391, %v390
    %v505 = vpack.c.b16 %v393, %v392
    %v506 = vpack.c.b16 %v395, %v394
    %v507 = vpack.c.b16 %v397, %v396
    %v508 = vpack.c.b16 %v399, %v398
    %v509 = vpack.c.b16 %v401, %v400
    %v510 = vpack.c.b16 %v403, %v402
    %v511 = vpack.c.b16 %v405, %v404
    %v512 = vpack.c.b16 %v407, %v406
    %v513 = vpack.c.b16 %v409, %v408
    %v514 = vpack.c.b16 %v411, %v410
    %v515 = vpack.c.b16 %v413, %v412
    %v516 = vpack.c.b16 %v415, %v414
    %v517 = vpack.c.b16 %v417, %v416
    %v518 = vpack.c.b16 %v419, %v418
    %v519 = vpack.c.b16 %v421, %v420
    %v520 = vpack.c.b16 %v423, %v422
    %v521 = vpack.c.b16 %v425, %v424
    %v522 = vpack.c.b16 %v427, %v426
    %v523 = vpack.c.b16 %v429, %v428
    %v524 = vpack.c.b16 %v431, %v430
    %v525 = vpack.c.b16 %v433, %v432
    %v526 = vpack.c.b16 %v435, %v434
    %v527 = vpack.c.b16 %v437, %v436
    %v528 = vpack.c.b16 %v439, %v438
    %v529 = vpack.c.b16 %v441, %v440
    %v530 = vpack.c.b16 %v443, %v442
    %v531 = vpack.c.b16 %v445, %v444
    %v532 = vpack.c.b16 %v447, %v446
    %v533 = vpack.c.b16 %v449, %v448
    %v534 = vpack.c.b16 %v451, %v450
    %v535 = vpack.c.b16 %v453, %v452
    %v536 = vpack.c.b16 %v455, %v454
    %v537 = vpack.c.b16 %v457, %v456
    %v538 = vpack.c.b16 %v459, %v458
    %v539 = vpack.c.b16 %v461, %v460
    %v540 = vpack.c.b16 %v463, %v462
    %v541 = vpack.c.b16 %v465, %v464
    %v542 = vpack.c.b16 %v467, %v466
    %v543 = vpack.c.b16 %v469, %v468
    %v544 = vpack.c.b16 %v471, %v470
    %v545 = vpack.c.b16 %v473, %v472
    %v546 = vpack.c.b16 %v475, %v474
    %v547 = vpack.c.b16 %v477, %v476
    %v548 = vpack.c.b16 %v479, %v478
    %v549 = vpack.c.b16 %v481, %v480
    %v550 = vpack.c.b16 %v483, %v482
    %v551 = vpack.c.b16 %v485, %v484
    %v552 = vpack.c.b16 %v487, %v486
    %v553 = vpack.c.b16 %v489, %v488
    %618 = vmatprep.subr.bf16.mxu0 0
    %619 = vmatpush1.bf16.msra.mxu0 %v490
    %620 = vmatprep.subr.bf16.mxu0 0
    %621 = vmatpush1.bf16.msra.mxu0 %v491
    %622 = vmatprep.subr.bf16.mxu0 0
    %623 = vmatpush1.bf16.msra.mxu0 %v492
    %624 = vmatprep.subr.bf16.mxu0 0
    %625 = vmatpush1.bf16.msra.mxu0 %v493
    %626 = vmatprep.subr.bf16.mxu0 0
    %627 = vmatpush1.bf16.msra.mxu0 %v494
    %628 = vmatprep.subr.bf16.mxu0 0
    %629 = vmatpush1.bf16.msra.mxu0 %v495
    %630 = vmatprep.subr.bf16.mxu0 0
    %631 = vmatpush1.bf16.msra.mxu0 %v496
    %632 = vmatprep.subr.bf16.mxu0 0
    %633 = vmatpush1.bf16.msra.mxu0 %v497
    %634 = vmatprep.subr.bf16.mxu0 0
    %635 = vmatpush1.bf16.msra.mxu0 %v498
    %636 = vmatprep.subr.bf16.mxu0 0
    %637 = vmatpush1.bf16.msra.mxu0 %v499
    %638 = vmatprep.subr.bf16.mxu0 0
    %639 = vmatpush1.bf16.msra.mxu0 %v500
    %640 = vmatprep.subr.bf16.mxu0 0
    %641 = vmatpush1.bf16.msra.mxu0 %v501
    %642 = vmatprep.subr.bf16.mxu0 0
    %643 = vmatpush1.bf16.msra.mxu0 %v502
    %644 = vmatprep.subr.bf16.mxu0 0
    %645 = vmatpush1.bf16.msra.mxu0 %v503
    %646 = vmatprep.subr.bf16.mxu0 0
    %647 = vmatpush1.bf16.msra.mxu0 %v504
    %648 = vmatprep.subr.bf16.mxu0 0
    %649 = vmatpush1.bf16.msra.mxu0 %v505
    %650 = vmatprep.mubr.bf16.mxu0 %v92
    %651 = vmatmul.mubr.bf16.gmra.mrb[0].mxu0 %v91
    %v652 = vpop.f32.mrb[0].mxu0
    %v653 = vadd.f32 %v232, %v652
    %v654 = vpop.f32.mrb[0].mxu0
    %v655 = vpop.f32.mrb[0].mxu0
    %v656 = vpop.f32.mrb[0].mxu0
    %657 = vdwg.mxu0
    %658 = vmatprep.subr.bf16.mxu0 0
    %659 = vmatpush1.bf16.msra.mxu0 %v506
    %660 = vmatprep.subr.bf16.mxu0 0
    %661 = vmatpush1.bf16.msra.mxu0 %v507
    %662 = vmatprep.subr.bf16.mxu0 0
    %663 = vmatpush1.bf16.msra.mxu0 %v508
    %664 = vmatprep.subr.bf16.mxu0 0
    %665 = vmatpush1.bf16.msra.mxu0 %v509
    %666 = vmatprep.subr.bf16.mxu0 0
    %667 = vmatpush1.bf16.msra.mxu0 %v510
    %668 = vmatprep.subr.bf16.mxu0 0
    %669 = vmatpush1.bf16.msra.mxu0 %v511
    %670 = vmatprep.subr.bf16.mxu0 0
    %671 = vmatpush1.bf16.msra.mxu0 %v512
    %672 = vmatprep.subr.bf16.mxu0 0
    %673 = vmatpush1.bf16.msra.mxu0 %v513
    %674 = vmatprep.subr.bf16.mxu0 0
    %675 = vmatpush1.bf16.msra.mxu0 %v514
    %676 = vmatprep.subr.bf16.mxu0 0
    %677 = vmatpush1.bf16.msra.mxu0 %v515
    %678 = vmatprep.subr.bf16.mxu0 0
    %679 = vmatpush1.bf16.msra.mxu0 %v516
    %680 = vmatprep.subr.bf16.mxu0 0
    %681 = vmatpush1.bf16.msra.mxu0 %v517
    %682 = vmatprep.subr.bf16.mxu0 0
    %683 = vmatpush1.bf16.msra.mxu0 %v518
    %684 = vmatprep.subr.bf16.mxu0 0
    %685 = vmatpush1.bf16.msra.mxu0 %v519
    %686 = vmatprep.subr.bf16.mxu0 0
    %687 = vmatpush1.bf16.msra.mxu0 %v520
    %688 = vmatprep.subr.bf16.mxu0 0
    %689 = vmatpush1.bf16.msra.mxu0 %v521
    %690 = vmatprep.mubr.bf16.mxu0 %v94
    %691 = vmatmul.mubr.bf16.gmra.mrb[0].mxu0 %v93
    %v692 = vpop.f32.mrb[0].mxu0
    %v693 = vadd.f32 %v653, %v692
    %v694 = vpop.f32.mrb[0].mxu0
    %v695 = vpop.f32.mrb[0].mxu0
    %v696 = vpop.f32.mrb[0].mxu0
    %697 = vdwg.mxu0
    %698 = vmatprep.subr.bf16.mxu0 0
    %699 = vmatpush1.bf16.msra.mxu0 %v522
    %700 = vmatprep.subr.bf16.mxu0 0
    %701 = vmatpush1.bf16.msra.mxu0 %v523
    %702 = vmatprep.subr.bf16.mxu0 0
    %703 = vmatpush1.bf16.msra.mxu0 %v524
    %704 = vmatprep.subr.bf16.mxu0 0
    %705 = vmatpush1.bf16.msra.mxu0 %v525
    %706 = vmatprep.subr.bf16.mxu0 0
    %707 = vmatpush1.bf16.msra.mxu0 %v526
    %708 = vmatprep.subr.bf16.mxu0 0
    %709 = vmatpush1.bf16.msra.mxu0 %v527
    %710 = vmatprep.subr.bf16.mxu0 0
    %711 = vmatpush1.bf16.msra.mxu0 %v528
    %712 = vmatprep.subr.bf16.mxu0 0
    %713 = vmatpush1.bf16.msra.mxu0 %v529
    %714 = vmatprep.subr.bf16.mxu0 0
    %715 = vmatpush1.bf16.msra.mxu0 %v530
    %716 = vmatprep.subr.bf16.mxu0 0
    %717 = vmatpush1.bf16.msra.mxu0 %v531
    %718 = vmatprep.subr.bf16.mxu0 0
    %719 = vmatpush1.bf16.msra.mxu0 %v532
    %720 = vmatprep.subr.bf16.mxu0 0
    %721 = vmatpush1.bf16.msra.mxu0 %v533
    %722 = vmatprep.subr.bf16.mxu0 0
    %723 = vmatpush1.bf16.msra.mxu0 %v534
    %724 = vmatprep.subr.bf16.mxu0 0
    %725 = vmatpush1.bf16.msra.mxu0 %v535
    %726 = vmatprep.subr.bf16.mxu0 0
    %727 = vmatpush1.bf16.msra.mxu0 %v536
    %728 = vmatprep.subr.bf16.mxu0 0
    %729 = vmatpush1.bf16.msra.mxu0 %v537
    %730 = vmatprep.mubr.bf16.mxu0 %v96
    %731 = vmatmul.mubr.bf16.gmra.mrb[0].mxu0 %v95
    %v732 = vpop.f32.mrb[0].mxu0
    %v733 = vadd.f32 %v693, %v732
    %v734 = vpop.f32.mrb[0].mxu0
    %v735 = vpop.f32.mrb[0].mxu0
    %v736 = vpop.f32.mrb[0].mxu0
    %737 = vdwg.mxu0
    %738 = vmatprep.subr.bf16.mxu0 0
    %739 = vmatpush1.bf16.msra.mxu0 %v538
    %740 = vmatprep.subr.bf16.mxu0 0
    %741 = vmatpush1.bf16.msra.mxu0 %v539
    %742 = vmatprep.subr.bf16.mxu0 0
    %743 = vmatpush1.bf16.msra.mxu0 %v540
    %744 = vmatprep.subr.bf16.mxu0 0
    %745 = vmatpush1.bf16.msra.mxu0 %v541
    %746 = vmatprep.subr.bf16.mxu0 0
    %747 = vmatpush1.bf16.msra.mxu0 %v542
    %748 = vmatprep.subr.bf16.mxu0 0
    %749 = vmatpush1.bf16.msra.mxu0 %v543
    %750 = vmatprep.subr.bf16.mxu0 0
    %751 = vmatpush1.bf16.msra.mxu0 %v544
    %752 = vmatprep.subr.bf16.mxu0 0
    %753 = vmatpush1.bf16.msra.mxu0 %v545
    %754 = vmatprep.subr.bf16.mxu0 0
    %755 = vmatpush1.bf16.msra.mxu0 %v546
    %756 = vmatprep.subr.bf16.mxu0 0
    %757 = vmatpush1.bf16.msra.mxu0 %v547
    %758 = vmatprep.subr.bf16.mxu0 0
    %759 = vmatpush1.bf16.msra.mxu0 %v548
    %760 = vmatprep.subr.bf16.mxu0 0
    %761 = vmatpush1.bf16.msra.mxu0 %v549
    %762 = vmatprep.subr.bf16.mxu0 0
    %763 = vmatpush1.bf16.msra.mxu0 %v550
    %764 = vmatprep.subr.bf16.mxu0 0
    %765 = vmatpush1.bf16.msra.mxu0 %v551
    %766 = vmatprep.subr.bf16.mxu0 0
    %767 = vmatpush1.bf16.msra.mxu0 %v552
    %768 = vmatprep.subr.bf16.mxu0 0
    %769 = vmatpush1.bf16.msra.mxu0 %v553
    %770 = vmatprep.mubr.bf16.mxu0 %v98
    %771 = vmatmul.mubr.bf16.gmra.mrb[0].mxu0 %v97
    %v772 = vpop.f32.mrb[0].mxu0
    %v773 = vadd.f32 %v733, %v772
    %v774 = vpop.f32.mrb[0].mxu0
    %v775 = vpop.f32.mrb[0].mxu0
    %v776 = vpop.f32.mrb[0].mxu0
    %777 = vdwg.mxu0
    %v778 = vld [vmem:[%s1] sm:$0x3]
    %780 = vrot.lane.b32.xlu0 %v778, 32
    %v781 = vpop.permute.xlu0 %780
    %vm783 = vcmask 261120
    %v784 = vsel %vm783, %v773, %v781
    %v785 = vpack.c.bf16 %v784, %v784
    %v786 = vld [vmem:[%s4] sm:$0xff]
    %v787 = vld [vmem:[%s4 + $0x8] sm:$0xff]
    %v788 = vld [vmem:[%s4 + $0x10] sm:$0xff]
    %v789 = vld [vmem:[%s4 + $0x18] sm:$0xff]
    %v790 = vld [vmem:[%s4 + $0x20] sm:$0xff]
    %v791 = vld [vmem:[%s4 + $0x28] sm:$0xff]
    %v792 = vld [vmem:[%s4 + $0x30] sm:$0xff]
    %v793 = vld [vmem:[%s4 + $0x38] sm:$0xff]
    %v794 = vld [vmem:[%s5] sm:$0x3]
    %v796 = vlaneseq
    %v797 = vshrl.u32 %v796, 7
    %v798 = vsub.s32 0, %v797
    %v799 = vrot.slane %v794, %v798
    %v800 = vlaneseq
    %v801 = vshrl.u32 %v800, 7
    %v802 = vsub.s32 1, %v801
    %v803 = vrot.slane %v794, %v802
    %v814 = vunpack.c.l.b16 %v786
    %v815 = vunpack.c.h.b16 %v786
    %v816 = vunpack.c.l.b16 %v787
    %v817 = vunpack.c.h.b16 %v787
    %v818 = vunpack.c.l.b16 %v788
    %v819 = vunpack.c.h.b16 %v788
    %v820 = vunpack.c.l.b16 %v789
    %v821 = vunpack.c.h.b16 %v789
    %v822 = vunpack.c.l.b16 %v790
    %v823 = vunpack.c.h.b16 %v790
    %v824 = vunpack.c.l.b16 %v791
    %v825 = vunpack.c.h.b16 %v791
    %v826 = vunpack.c.l.b16 %v792
    %v827 = vunpack.c.h.b16 %v792
    %v828 = vunpack.c.l.b16 %v793
    %v829 = vunpack.c.h.b16 %v793
    %v830 = vpack.c.b16 %v816, %v814
    %v831 = vpack.c.b16 %v817, %v815
    %v832 = vpack.c.b16 %v820, %v818
    %v833 = vpack.c.b16 %v821, %v819
    %v834 = vpack.c.b16 %v824, %v822
    %v835 = vpack.c.b16 %v825, %v823
    %v836 = vpack.c.b16 %v828, %v826
    %v837 = vpack.c.b16 %v829, %v827
    %vm846 = vcmask 523264
    %v848 = vsel %vm846, %v785, 0
    %850 = vmatprep.subr.bf16.mxu0 %v831
    %851 = vmatpush1.bf16.msra.mxu0 %v830
    %852 = vmatprep.subr.bf16.mxu0 %v833
    %853 = vmatpush1.bf16.msra.mxu0 %v832
    %854 = vmatprep.subr.bf16.mxu0 %v835
    %855 = vmatpush1.bf16.msra.mxu0 %v834
    %856 = vmatprep.subr.bf16.mxu0 %v837
    %857 = vmatpush1.bf16.msra.mxu0 %v836
    %858 = vmatprep.subr.bf16.mxu0 0
    %859 = vmatpush1.bf16.msra.mxu0 0
    %860 = vmatprep.subr.bf16.mxu0 0
    %861 = vmatpush1.bf16.msra.mxu0 0
    %862 = vmatprep.subr.bf16.mxu0 0
    %863 = vmatpush1.bf16.msra.mxu0 0
    %864 = vmatprep.subr.bf16.mxu0 0
    %865 = vmatpush1.bf16.msra.mxu0 0
    %866 = vmatprep.subr.bf16.mxu0 0
    %867 = vmatpush1.bf16.msra.mxu0 0
    %868 = vmatprep.subr.bf16.mxu0 0
    %869 = vmatpush1.bf16.msra.mxu0 0
    %870 = vmatprep.subr.bf16.mxu0 0
    %871 = vmatpush1.bf16.msra.mxu0 0
    %872 = vmatprep.subr.bf16.mxu0 0
    %873 = vmatpush1.bf16.msra.mxu0 0
    %874 = vmatprep.subr.bf16.mxu0 0
    %875 = vmatpush1.bf16.msra.mxu0 0
    %876 = vmatprep.subr.bf16.mxu0 0
    %877 = vmatpush1.bf16.msra.mxu0 0
    %878 = vmatprep.subr.bf16.mxu0 0
    %879 = vmatpush1.bf16.msra.mxu0 0
    %880 = vmatprep.subr.bf16.mxu0 0
    %881 = vmatpush1.bf16.msra.mxu0 0
    %882 = vmatprep.mubr.bf16.mxu0 0
    %883 = vmatmul.mubr.bf16.gmra.mrb[0].mxu0 %v848
    %v884 = vpop.f32.mrb[0].mxu0
    %v885 = vadd.f32 %v799, %v884
    %v886 = vpop.f32.mrb[0].mxu0
    %v887 = vadd.f32 %v803, %v886
    %v888 = vpop.f32.mrb[0].mxu0
    %v889 = vpop.f32.mrb[0].mxu0
    %890 = vdwg.mxu0
    %v891 = vxor.u32 %v885, 2147483648
    %v892 = vxor.u32 %v887, 2147483648
    %v893 = vmul.f32 %v891, 1.442695
    %v894 = vpow.pop %v893
    %v895 = vmul.f32 %v892, 1.442695
    %v896 = vpow.pop %v895
    %v897 = vadd.f32 %v894, 1.0
    %v898 = vadd.f32 %v896, 1.0
    %v899 = vrcp.pop %v897
    %v900 = vmul.f32 1.0, %v899
    %v901 = vrcp.pop %v898
    %v902 = vmul.f32 1.0, %v901
    %v903 = vmul.f32 %v885, %v900
    %v904 = vmul.f32 %v887, %v902
    %v905 = vpack.c.bf16 %v903, %v903
    %v906 = vpack.c.bf16 %v904, %v904
    %v907 = vld [vmem:[#allocation2] sm:$0xff]
    %v908 = vld [vmem:[#allocation2 + $0x8] sm:$0xff]
    %v909 = vld [vmem:[#allocation2 + $0x10] sm:$0xff]
    %v910 = vld [vmem:[#allocation2 + $0x18] sm:$0xff]
    %v911 = vld [vmem:[#allocation2 + $0x20] sm:$0xff]
    %v912 = vld [vmem:[#allocation2 + $0x28] sm:$0xff]
    %v913 = vld [vmem:[#allocation2 + $0x30] sm:$0xff]
    %v914 = vld [vmem:[#allocation2 + $0x38] sm:$0xff]
    %v915 = vld [vmem:[#allocation2 + $0x40] sm:$0xff]
    %v916 = vld [vmem:[#allocation2 + $0x48] sm:$0xff]
    %v917 = vld [vmem:[#allocation2 + $0x50] sm:$0xff]
    %v918 = vld [vmem:[#allocation2 + $0x58] sm:$0xff]
    %v919 = vld [vmem:[#allocation2 + $0x60] sm:$0xff]
    %v920 = vld [vmem:[#allocation2 + $0x68] sm:$0xff]
    %v921 = vld [vmem:[#allocation2 + $0x70] sm:$0xff]
    %v922 = vld [vmem:[#allocation2 + $0x78] sm:$0xff]
    %v923 = vld [vmem:[#allocation2 + $0x80] sm:$0xff]
    %v924 = vld [vmem:[#allocation2 + $0x88] sm:$0xff]
    %v925 = vld [vmem:[#allocation2 + $0x90] sm:$0xff]
    %v926 = vld [vmem:[#allocation2 + $0x98] sm:$0xff]
    %v927 = vld [vmem:[#allocation2 + $0xa0] sm:$0xff]
    %v928 = vld [vmem:[#allocation2 + $0xa8] sm:$0xff]
    %v929 = vld [vmem:[#allocation2 + $0xb0] sm:$0xff]
    %v930 = vld [vmem:[#allocation2 + $0xb8] sm:$0xff]
    %v931 = vld [vmem:[#allocation2 + $0xc0] sm:$0xff]
    %v932 = vld [vmem:[#allocation2 + $0xc8] sm:$0xff]
    %v933 = vld [vmem:[#allocation2 + $0xd0] sm:$0xff]
    %v934 = vld [vmem:[#allocation2 + $0xd8] sm:$0xff]
    %v935 = vld [vmem:[#allocation2 + $0xe0] sm:$0xff]
    %v936 = vld [vmem:[#allocation2 + $0xe8] sm:$0xff]
    %v937 = vld [vmem:[#allocation2 + $0xf0] sm:$0xff]
    %v938 = vld [vmem:[#allocation2 + $0xf8] sm:$0xff]
    %v939 = vld [vmem:[#allocation2 + $0x100] sm:$0xff]
    %v940 = vld [vmem:[#allocation2 + $0x108] sm:$0xff]
    %v941 = vld [vmem:[#allocation2 + $0x110] sm:$0xff]
    %v942 = vld [vmem:[#allocation2 + $0x118] sm:$0xff]
    %v943 = vld [vmem:[#allocation2 + $0x120] sm:$0xff]
    %v944 = vld [vmem:[#allocation2 + $0x128] sm:$0xff]
    %v945 = vld [vmem:[#allocation2 + $0x130] sm:$0xff]
    %v946 = vld [vmem:[#allocation2 + $0x138] sm:$0xff]
    %v947 = vld [vmem:[#allocation2 + $0x140] sm:$0xff]
    %v948 = vld [vmem:[#allocation2 + $0x148] sm:$0xff]
    %v949 = vld [vmem:[#allocation2 + $0x150] sm:$0xff]
    %v950 = vld [vmem:[#allocation2 + $0x158] sm:$0xff]
    %v951 = vld [vmem:[#allocation2 + $0x160] sm:$0xff]
    %v952 = vld [vmem:[#allocation2 + $0x168] sm:$0xff]
    %v953 = vld [vmem:[#allocation2 + $0x170] sm:$0xff]
    %v954 = vld [vmem:[#allocation2 + $0x178] sm:$0xff]
    %v955 = vld [vmem:[#allocation2 + $0x180] sm:$0xff]
    %v956 = vld [vmem:[#allocation2 + $0x188] sm:$0xff]
    %v957 = vld [vmem:[#allocation2 + $0x190] sm:$0xff]
    %v958 = vld [vmem:[#allocation2 + $0x198] sm:$0xff]
    %v959 = vld [vmem:[#allocation2 + $0x1a0] sm:$0xff]
    %v960 = vld [vmem:[#allocation2 + $0x1a8] sm:$0xff]
    %v961 = vld [vmem:[#allocation2 + $0x1b0] sm:$0xff]
    %v962 = vld [vmem:[#allocation2 + $0x1b8] sm:$0xff]
    %v963 = vld [vmem:[#allocation2 + $0x1c0] sm:$0xff]
    %v964 = vld [vmem:[#allocation2 + $0x1c8] sm:$0xff]
    %v965 = vld [vmem:[#allocation2 + $0x1d0] sm:$0xff]
    %v966 = vld [vmem:[#allocation2 + $0x1d8] sm:$0xff]
    %v967 = vld [vmem:[#allocation2 + $0x1e0] sm:$0xff]
    %v968 = vld [vmem:[#allocation2 + $0x1e8] sm:$0xff]
    %v969 = vld [vmem:[#allocation2 + $0x1f0] sm:$0xff]
    %v970 = vld [vmem:[#allocation2 + $0x1f8] sm:$0xff]
    %v971 = vld [vmem:[#allocation2 + $0x200] sm:$0xff]
    %v972 = vld [vmem:[#allocation2 + $0x208] sm:$0xff]
    %v973 = vld [vmem:[#allocation2 + $0x210] sm:$0xff]
    %v974 = vld [vmem:[#allocation2 + $0x218] sm:$0xff]
    %v975 = vld [vmem:[#allocation2 + $0x220] sm:$0xff]
    %v976 = vld [vmem:[#allocation2 + $0x228] sm:$0xff]
    %v977 = vld [vmem:[#allocation2 + $0x230] sm:$0xff]
    %v978 = vld [vmem:[#allocation2 + $0x238] sm:$0xff]
    %v979 = vld [vmem:[#allocation2 + $0x240] sm:$0xff]
    %v980 = vld [vmem:[#allocation2 + $0x248] sm:$0xff]
    %v981 = vld [vmem:[#allocation2 + $0x250] sm:$0xff]
    %v982 = vld [vmem:[#allocation2 + $0x258] sm:$0xff]
    %v983 = vld [vmem:[#allocation2 + $0x260] sm:$0xff]
    %v984 = vld [vmem:[#allocation2 + $0x268] sm:$0xff]
    %v985 = vld [vmem:[#allocation2 + $0x270] sm:$0xff]
    %v986 = vld [vmem:[#allocation2 + $0x278] sm:$0xff]
    %v987 = vld [vmem:[#allocation2 + $0x280] sm:$0xff]
    %v988 = vld [vmem:[#allocation2 + $0x288] sm:$0xff]
    %v989 = vld [vmem:[#allocation2 + $0x290] sm:$0xff]
    %v990 = vld [vmem:[#allocation2 + $0x298] sm:$0xff]
    %v991 = vld [vmem:[#allocation2 + $0x2a0] sm:$0xff]
    %v992 = vld [vmem:[#allocation2 + $0x2a8] sm:$0xff]
    %v993 = vld [vmem:[#allocation2 + $0x2b0] sm:$0xff]
    %v994 = vld [vmem:[#allocation2 + $0x2b8] sm:$0xff]
    %v995 = vld [vmem:[#allocation2 + $0x2c0] sm:$0xff]
    %v996 = vld [vmem:[#allocation2 + $0x2c8] sm:$0xff]
    %v997 = vld [vmem:[#allocation2 + $0x2d0] sm:$0xff]
    %v998 = vld [vmem:[#allocation2 + $0x2d8] sm:$0xff]
    %v999 = vld [vmem:[#allocation2 + $0x2e0] sm:$0xff]
    %v1000 = vld [vmem:[#allocation2 + $0x2e8] sm:$0xff]
    %v1001 = vld [vmem:[#allocation2 + $0x2f0] sm:$0xff]
    %v1002 = vld [vmem:[#allocation2 + $0x2f8] sm:$0xff]
    %v1003 = vld [vmem:[#allocation2 + $0x300] sm:$0xff]
    %v1004 = vld [vmem:[#allocation2 + $0x308] sm:$0xff]
    %v1005 = vld [vmem:[#allocation2 + $0x310] sm:$0xff]
    %v1006 = vld [vmem:[#allocation2 + $0x318] sm:$0xff]
    %v1007 = vld [vmem:[#allocation2 + $0x320] sm:$0xff]
    %v1008 = vld [vmem:[#allocation2 + $0x328] sm:$0xff]
    %v1009 = vld [vmem:[#allocation2 + $0x330] sm:$0xff]
    %v1010 = vld [vmem:[#allocation2 + $0x338] sm:$0xff]
    %v1011 = vld [vmem:[#allocation2 + $0x340] sm:$0xff]
    %v1012 = vld [vmem:[#allocation2 + $0x348] sm:$0xff]
    %v1013 = vld [vmem:[#allocation2 + $0x350] sm:$0xff]
    %v1014 = vld [vmem:[#allocation2 + $0x358] sm:$0xff]
    %v1015 = vld [vmem:[#allocation2 + $0x360] sm:$0xff]
    %v1016 = vld [vmem:[#allocation2 + $0x368] sm:$0xff]
    %v1017 = vld [vmem:[#allocation2 + $0x370] sm:$0xff]
    %v1018 = vld [vmem:[#allocation2 + $0x378] sm:$0xff]
    %v1019 = vld [vmem:[#allocation2 + $0x380] sm:$0xff]
    %v1020 = vld [vmem:[#allocation2 + $0x388] sm:$0xff]
    %v1021 = vld [vmem:[#allocation2 + $0x390] sm:$0xff]
    %v1022 = vld [vmem:[#allocation2 + $0x398] sm:$0xff]
    %v1023 = vld [vmem:[#allocation2 + $0x3a0] sm:$0xff]
    %v1024 = vld [vmem:[#allocation2 + $0x3a8] sm:$0xff]
    %v1025 = vld [vmem:[#allocation2 + $0x3b0] sm:$0xff]
    %v1026 = vld [vmem:[#allocation2 + $0x3b8] sm:$0xff]
    %v1027 = vld [vmem:[#allocation2 + $0x3c0] sm:$0xff]
    %v1028 = vld [vmem:[#allocation2 + $0x3c8] sm:$0xff]
    %v1029 = vld [vmem:[#allocation2 + $0x3d0] sm:$0xff]
    %v1030 = vld [vmem:[#allocation2 + $0x3d8] sm:$0xff]
    %v1031 = vld [vmem:[#allocation2 + $0x3e0] sm:$0xff]
    %v1032 = vld [vmem:[#allocation2 + $0x3e8] sm:$0xff]
    %v1033 = vld [vmem:[#allocation2 + $0x3f0] sm:$0xff]
    %v1034 = vld [vmem:[#allocation2 + $0x3f8] sm:$0xff]
    %v1035 = vld [vmem:[%s7] sm:$0xff]
    %v1037 = vlaneseq
    %v1038 = vshrl.u32 %v1037, 7
    %v1039 = vsub.s32 0, %v1038
    %v1040 = vrot.slane %v1035, %v1039
    %v1041 = vlaneseq
    %v1042 = vshrl.u32 %v1041, 7
    %v1043 = vsub.s32 1, %v1042
    %v1044 = vrot.slane %v1035, %v1043
    %v1045 = vlaneseq
    %v1046 = vshrl.u32 %v1045, 7
    %v1047 = vsub.s32 2, %v1046
    %v1048 = vrot.slane %v1035, %v1047
    %v1049 = vlaneseq
    %v1050 = vshrl.u32 %v1049, 7
    %v1051 = vsub.s32 3, %v1050
    %v1052 = vrot.slane %v1035, %v1051
    %v1053 = vlaneseq
    %v1054 = vshrl.u32 %v1053, 7
    %v1055 = vsub.s32 4, %v1054
    %v1056 = vrot.slane %v1035, %v1055
    %v1057 = vlaneseq
    %v1058 = vshrl.u32 %v1057, 7
    %v1059 = vsub.s32 5, %v1058
    %v1060 = vrot.slane %v1035, %v1059
    %v1061 = vlaneseq
    %v1062 = vshrl.u32 %v1061, 7
    %v1063 = vsub.s32 6, %v1062
    %v1064 = vrot.slane %v1035, %v1063
    %v1065 = vlaneseq
    %v1066 = vshrl.u32 %v1065, 7
    %v1067 = vsub.s32 7, %v1066
    %v1068 = vrot.slane %v1035, %v1067
    %v1205 = vunpack.c.l.b16 %v907
    %v1206 = vunpack.c.h.b16 %v907
    %v1207 = vunpack.c.l.b16 %v908
    %v1208 = vunpack.c.h.b16 %v908
    %v1209 = vunpack.c.l.b16 %v909
    %v1210 = vunpack.c.h.b16 %v909
    %v1211 = vunpack.c.l.b16 %v910
    %v1212 = vunpack.c.h.b16 %v910
    %v1213 = vunpack.c.l.b16 %v911
    %v1214 = vunpack.c.h.b16 %v911
    %v1215 = vunpack.c.l.b16 %v912
    %v1216 = vunpack.c.h.b16 %v912
    %v1217 = vunpack.c.l.b16 %v913
    %v1218 = vunpack.c.h.b16 %v913
    %v1219 = vunpack.c.l.b16 %v914
    %v1220 = vunpack.c.h.b16 %v914
    %v1221 = vunpack.c.l.b16 %v915
    %v1222 = vunpack.c.h.b16 %v915
    %v1223 = vunpack.c.l.b16 %v916
    %v1224 = vunpack.c.h.b16 %v916
    %v1225 = vunpack.c.l.b16 %v917
    %v1226 = vunpack.c.h.b16 %v917
    %v1227 = vunpack.c.l.b16 %v918
    %v1228 = vunpack.c.h.b16 %v918
    %v1229 = vunpack.c.l.b16 %v919
    %v1230 = vunpack.c.h.b16 %v919
    %v1231 = vunpack.c.l.b16 %v920
    %v1232 = vunpack.c.h.b16 %v920
    %v1233 = vunpack.c.l.b16 %v921
    %v1234 = vunpack.c.h.b16 %v921
    %v1235 = vunpack.c.l.b16 %v922
    %v1236 = vunpack.c.h.b16 %v922
    %v1237 = vunpack.c.l.b16 %v923
    %v1238 = vunpack.c.h.b16 %v923
    %v1239 = vunpack.c.l.b16 %v924
    %v1240 = vunpack.c.h.b16 %v924
    %v1241 = vunpack.c.l.b16 %v925
    %v1242 = vunpack.c.h.b16 %v925
    %v1243 = vunpack.c.l.b16 %v926
    %v1244 = vunpack.c.h.b16 %v926
    %v1245 = vunpack.c.l.b16 %v927
    %v1246 = vunpack.c.h.b16 %v927
    %v1247 = vunpack.c.l.b16 %v928
    %v1248 = vunpack.c.h.b16 %v928
    %v1249 = vunpack.c.l.b16 %v929
    %v1250 = vunpack.c.h.b16 %v929
    %v1251 = vunpack.c.l.b16 %v930
    %v1252 = vunpack.c.h.b16 %v930
    %v1253 = vunpack.c.l.b16 %v931
    %v1254 = vunpack.c.h.b16 %v931
    %v1255 = vunpack.c.l.b16 %v932
    %v1256 = vunpack.c.h.b16 %v932
    %v1257 = vunpack.c.l.b16 %v933
    %v1258 = vunpack.c.h.b16 %v933
    %v1259 = vunpack.c.l.b16 %v934
    %v1260 = vunpack.c.h.b16 %v934
    %v1261 = vunpack.c.l.b16 %v935
    %v1262 = vunpack.c.h.b16 %v935
    %v1263 = vunpack.c.l.b16 %v936
    %v1264 = vunpack.c.h.b16 %v936
    %v1265 = vunpack.c.l.b16 %v937
    %v1266 = vunpack.c.h.b16 %v937
    %v1267 = vunpack.c.l.b16 %v938
    %v1268 = vunpack.c.h.b16 %v938
    %v1269 = vunpack.c.l.b16 %v939
    %v1270 = vunpack.c.h.b16 %v939
    %v1271 = vunpack.c.l.b16 %v940
    %v1272 = vunpack.c.h.b16 %v940
    %v1273 = vunpack.c.l.b16 %v941
    %v1274 = vunpack.c.h.b16 %v941
    %v1275 = vunpack.c.l.b16 %v942
    %v1276 = vunpack.c.h.b16 %v942
    %v1277 = vunpack.c.l.b16 %v943
    %v1278 = vunpack.c.h.b16 %v943
    %v1279 = vunpack.c.l.b16 %v944
    %v1280 = vunpack.c.h.b16 %v944
    %v1281 = vunpack.c.l.b16 %v945
    %v1282 = vunpack.c.h.b16 %v945
    %v1283 = vunpack.c.l.b16 %v946
    %v1284 = vunpack.c.h.b16 %v946
    %v1285 = vunpack.c.l.b16 %v947
    %v1286 = vunpack.c.h.b16 %v947
    %v1287 = vunpack.c.l.b16 %v948
    %v1288 = vunpack.c.h.b16 %v948
    %v1289 = vunpack.c.l.b16 %v949
    %v1290 = vunpack.c.h.b16 %v949
    %v1291 = vunpack.c.l.b16 %v950
    %v1292 = vunpack.c.h.b16 %v950
    %v1293 = vunpack.c.l.b16 %v951
    %v1294 = vunpack.c.h.b16 %v951
    %v1295 = vunpack.c.l.b16 %v952
    %v1296 = vunpack.c.h.b16 %v952
    %v1297 = vunpack.c.l.b16 %v953
    %v1298 = vunpack.c.h.b16 %v953
    %v1299 = vunpack.c.l.b16 %v954
    %v1300 = vunpack.c.h.b16 %v954
    %v1301 = vunpack.c.l.b16 %v955
    %v1302 = vunpack.c.h.b16 %v955
    %v1303 = vunpack.c.l.b16 %v956
    %v1304 = vunpack.c.h.b16 %v956
    %v1305 = vunpack.c.l.b16 %v957
    %v1306 = vunpack.c.h.b16 %v957
    %v1307 = vunpack.c.l.b16 %v958
    %v1308 = vunpack.c.h.b16 %v958
    %v1309 = vunpack.c.l.b16 %v959
    %v1310 = vunpack.c.h.b16 %v959
    %v1311 = vunpack.c.l.b16 %v960
    %v1312 = vunpack.c.h.b16 %v960
    %v1313 = vunpack.c.l.b16 %v961
    %v1314 = vunpack.c.h.b16 %v961
    %v1315 = vunpack.c.l.b16 %v962
    %v1316 = vunpack.c.h.b16 %v962
    %v1317 = vunpack.c.l.b16 %v963
    %v1318 = vunpack.c.h.b16 %v963
    %v1319 = vunpack.c.l.b16 %v964
    %v1320 = vunpack.c.h.b16 %v964
    %v1321 = vunpack.c.l.b16 %v965
    %v1322 = vunpack.c.h.b16 %v965
    %v1323 = vunpack.c.l.b16 %v966
    %v1324 = vunpack.c.h.b16 %v966
    %v1325 = vunpack.c.l.b16 %v967
    %v1326 = vunpack.c.h.b16 %v967
    %v1327 = vunpack.c.l.b16 %v968
    %v1328 = vunpack.c.h.b16 %v968
    %v1329 = vunpack.c.l.b16 %v969
    %v1330 = vunpack.c.h.b16 %v969
    %v1331 = vunpack.c.l.b16 %v970
    %v1332 = vunpack.c.h.b16 %v970
    %v1333 = vunpack.c.l.b16 %v971
    %v1334 = vunpack.c.h.b16 %v971
    %v1335 = vunpack.c.l.b16 %v972
    %v1336 = vunpack.c.h.b16 %v972
    %v1337 = vunpack.c.l.b16 %v973
    %v1338 = vunpack.c.h.b16 %v973
    %v1339 = vunpack.c.l.b16 %v974
    %v1340 = vunpack.c.h.b16 %v974
    %v1341 = vunpack.c.l.b16 %v975
    %v1342 = vunpack.c.h.b16 %v975
    %v1343 = vunpack.c.l.b16 %v976
    %v1344 = vunpack.c.h.b16 %v976
    %v1345 = vunpack.c.l.b16 %v977
    %v1346 = vunpack.c.h.b16 %v977
    %v1347 = vunpack.c.l.b16 %v978
    %v1348 = vunpack.c.h.b16 %v978
    %v1349 = vunpack.c.l.b16 %v979
    %v1350 = vunpack.c.h.b16 %v979
    %v1351 = vunpack.c.l.b16 %v980
    %v1352 = vunpack.c.h.b16 %v980
    %v1353 = vunpack.c.l.b16 %v981
    %v1354 = vunpack.c.h.b16 %v981
    %v1355 = vunpack.c.l.b16 %v982
    %v1356 = vunpack.c.h.b16 %v982
    %v1357 = vunpack.c.l.b16 %v983
    %v1358 = vunpack.c.h.b16 %v983
    %v1359 = vunpack.c.l.b16 %v984
    %v1360 = vunpack.c.h.b16 %v984
    %v1361 = vunpack.c.l.b16 %v985
    %v1362 = vunpack.c.h.b16 %v985
    %v1363 = vunpack.c.l.b16 %v986
    %v1364 = vunpack.c.h.b16 %v986
    %v1365 = vunpack.c.l.b16 %v987
    %v1366 = vunpack.c.h.b16 %v987
    %v1367 = vunpack.c.l.b16 %v988
    %v1368 = vunpack.c.h.b16 %v988
    %v1369 = vunpack.c.l.b16 %v989
    %v1370 = vunpack.c.h.b16 %v989
    %v1371 = vunpack.c.l.b16 %v990
    %v1372 = vunpack.c.h.b16 %v990
    %v1373 = vunpack.c.l.b16 %v991
    %v1374 = vunpack.c.h.b16 %v991
    %v1375 = vunpack.c.l.b16 %v992
    %v1376 = vunpack.c.h.b16 %v992
    %v1377 = vunpack.c.l.b16 %v993
    %v1378 = vunpack.c.h.b16 %v993
    %v1379 = vunpack.c.l.b16 %v994
    %v1380 = vunpack.c.h.b16 %v994
    %v1381 = vunpack.c.l.b16 %v995
    %v1382 = vunpack.c.h.b16 %v995
    %v1383 = vunpack.c.l.b16 %v996
    %v1384 = vunpack.c.h.b16 %v996
    %v1385 = vunpack.c.l.b16 %v997
    %v1386 = vunpack.c.h.b16 %v997
    %v1387 = vunpack.c.l.b16 %v998
    %v1388 = vunpack.c.h.b16 %v998
    %v1389 = vunpack.c.l.b16 %v999
    %v1390 = vunpack.c.h.b16 %v999
    %v1391 = vunpack.c.l.b16 %v1000
    %v1392 = vunpack.c.h.b16 %v1000
    %v1393 = vunpack.c.l.b16 %v1001
    %v1394 = vunpack.c.h.b16 %v1001
    %v1395 = vunpack.c.l.b16 %v1002
    %v1396 = vunpack.c.h.b16 %v1002
    %v1397 = vunpack.c.l.b16 %v1003
    %v1398 = vunpack.c.h.b16 %v1003
    %v1399 = vunpack.c.l.b16 %v1004
    %v1400 = vunpack.c.h.b16 %v1004
    %v1401 = vunpack.c.l.b16 %v1005
    %v1402 = vunpack.c.h.b16 %v1005
    %v1403 = vunpack.c.l.b16 %v1006
    %v1404 = vunpack.c.h.b16 %v1006
    %v1405 = vunpack.c.l.b16 %v1007
    %v1406 = vunpack.c.h.b16 %v1007
    %v1407 = vunpack.c.l.b16 %v1008
    %v1408 = vunpack.c.h.b16 %v1008
    %v1409 = vunpack.c.l.b16 %v1009
    %v1410 = vunpack.c.h.b16 %v1009
    %v1411 = vunpack.c.l.b16 %v1010
    %v1412 = vunpack.c.h.b16 %v1010
    %v1413 = vunpack.c.l.b16 %v1011
    %v1414 = vunpack.c.h.b16 %v1011
    %v1415 = vunpack.c.l.b16 %v1012
    %v1416 = vunpack.c.h.b16 %v1012
    %v1417 = vunpack.c.l.b16 %v1013
    %v1418 = vunpack.c.h.b16 %v1013
    %v1419 = vunpack.c.l.b16 %v1014
    %v1420 = vunpack.c.h.b16 %v1014
    %v1421 = vunpack.c.l.b16 %v1015
    %v1422 = vunpack.c.h.b16 %v1015
    %v1423 = vunpack.c.l.b16 %v1016
    %v1424 = vunpack.c.h.b16 %v1016
    %v1425 = vunpack.c.l.b16 %v1017
    %v1426 = vunpack.c.h.b16 %v1017
    %v1427 = vunpack.c.l.b16 %v1018
    %v1428 = vunpack.c.h.b16 %v1018
    %v1429 = vunpack.c.l.b16 %v1019
    %v1430 = vunpack.c.h.b16 %v1019
    %v1431 = vunpack.c.l.b16 %v1020
    %v1432 = vunpack.c.h.b16 %v1020
    %v1433 = vunpack.c.l.b16 %v1021
    %v1434 = vunpack.c.h.b16 %v1021
    %v1435 = vunpack.c.l.b16 %v1022
    %v1436 = vunpack.c.h.b16 %v1022
    %v1437 = vunpack.c.l.b16 %v1023
    %v1438 = vunpack.c.h.b16 %v1023
    %v1439 = vunpack.c.l.b16 %v1024
    %v1440 = vunpack.c.h.b16 %v1024
    %v1441 = vunpack.c.l.b16 %v1025
    %v1442 = vunpack.c.h.b16 %v1025
    %v1443 = vunpack.c.l.b16 %v1026
    %v1444 = vunpack.c.h.b16 %v1026
    %v1445 = vunpack.c.l.b16 %v1027
    %v1446 = vunpack.c.h.b16 %v1027
    %v1447 = vunpack.c.l.b16 %v1028
    %v1448 = vunpack.c.h.b16 %v1028
    %v1449 = vunpack.c.l.b16 %v1029
    %v1450 = vunpack.c.h.b16 %v1029
    %v1451 = vunpack.c.l.b16 %v1030
    %v1452 = vunpack.c.h.b16 %v1030
    %v1453 = vunpack.c.l.b16 %v1031
    %v1454 = vunpack.c.h.b16 %v1031
    %v1455 = vunpack.c.l.b16 %v1032
    %v1456 = vunpack.c.h.b16 %v1032
    %v1457 = vunpack.c.l.b16 %v1033
    %v1458 = vunpack.c.h.b16 %v1033
    %v1459 = vunpack.c.l.b16 %v1034
    %v1460 = vunpack.c.h.b16 %v1034
    %v1461 = vpack.c.b16 %v1213, %v1205
    %v1462 = vpack.c.b16 %v1214, %v1206
    %v1463 = vpack.c.b16 %v1215, %v1207
    %v1464 = vpack.c.b16 %v1216, %v1208
    %v1465 = vpack.c.b16 %v1217, %v1209
    %v1466 = vpack.c.b16 %v1218, %v1210
    %v1467 = vpack.c.b16 %v1219, %v1211
    %v1468 = vpack.c.b16 %v1220, %v1212
    %v1469 = vpack.c.b16 %v1229, %v1221
    %v1470 = vpack.c.b16 %v1230, %v1222
    %v1471 = vpack.c.b16 %v1231, %v1223
    %v1472 = vpack.c.b16 %v1232, %v1224
    %v1473 = vpack.c.b16 %v1233, %v1225
    %v1474 = vpack.c.b16 %v1234, %v1226
    %v1475 = vpack.c.b16 %v1235, %v1227
    %v1476 = vpack.c.b16 %v1236, %v1228
    %v1477 = vpack.c.b16 %v1245, %v1237
    %v1478 = vpack.c.b16 %v1246, %v1238
    %v1479 = vpack.c.b16 %v1247, %v1239
    %v1480 = vpack.c.b16 %v1248, %v1240
    %v1481 = vpack.c.b16 %v1249, %v1241
    %v1482 = vpack.c.b16 %v1250, %v1242
    %v1483 = vpack.c.b16 %v1251, %v1243
    %v1484 = vpack.c.b16 %v1252, %v1244
    %v1485 = vpack.c.b16 %v1261, %v1253
    %v1486 = vpack.c.b16 %v1262, %v1254
    %v1487 = vpack.c.b16 %v1263, %v1255
    %v1488 = vpack.c.b16 %v1264, %v1256
    %v1489 = vpack.c.b16 %v1265, %v1257
    %v1490 = vpack.c.b16 %v1266, %v1258
    %v1491 = vpack.c.b16 %v1267, %v1259
    %v1492 = vpack.c.b16 %v1268, %v1260
    %v1493 = vpack.c.b16 %v1277, %v1269
    %v1494 = vpack.c.b16 %v1278, %v1270
    %v1495 = vpack.c.b16 %v1279, %v1271
    %v1496 = vpack.c.b16 %v1280, %v1272
    %v1497 = vpack.c.b16 %v1281, %v1273
    %v1498 = vpack.c.b16 %v1282, %v1274
    %v1499 = vpack.c.b16 %v1283, %v1275
    %v1500 = vpack.c.b16 %v1284, %v1276
    %v1501 = vpack.c.b16 %v1293, %v1285
    %v1502 = vpack.c.b16 %v1294, %v1286
    %v1503 = vpack.c.b16 %v1295, %v1287
    %v1504 = vpack.c.b16 %v1296, %v1288
    %v1505 = vpack.c.b16 %v1297, %v1289
    %v1506 = vpack.c.b16 %v1298, %v1290
    %v1507 = vpack.c.b16 %v1299, %v1291
    %v1508 = vpack.c.b16 %v1300, %v1292
    %v1509 = vpack.c.b16 %v1309, %v1301
    %v1510 = vpack.c.b16 %v1310, %v1302
    %v1511 = vpack.c.b16 %v1311, %v1303
    %v1512 = vpack.c.b16 %v1312, %v1304
    %v1513 = vpack.c.b16 %v1313, %v1305
    %v1514 = vpack.c.b16 %v1314, %v1306
    %v1515 = vpack.c.b16 %v1315, %v1307
    %v1516 = vpack.c.b16 %v1316, %v1308
    %v1517 = vpack.c.b16 %v1325, %v1317
    %v1518 = vpack.c.b16 %v1326, %v1318
    %v1519 = vpack.c.b16 %v1327, %v1319
    %v1520 = vpack.c.b16 %v1328, %v1320
    %v1521 = vpack.c.b16 %v1329, %v1321
    %v1522 = vpack.c.b16 %v1330, %v1322
    %v1523 = vpack.c.b16 %v1331, %v1323
    %v1524 = vpack.c.b16 %v1332, %v1324
    %v1525 = vpack.c.b16 %v1341, %v1333
    %v1526 = vpack.c.b16 %v1342, %v1334
    %v1527 = vpack.c.b16 %v1343, %v1335
    %v1528 = vpack.c.b16 %v1344, %v1336
    %v1529 = vpack.c.b16 %v1345, %v1337
    %v1530 = vpack.c.b16 %v1346, %v1338
    %v1531 = vpack.c.b16 %v1347, %v1339
    %v1532 = vpack.c.b16 %v1348, %v1340
    %v1533 = vpack.c.b16 %v1357, %v1349
    %v1534 = vpack.c.b16 %v1358, %v1350
    %v1535 = vpack.c.b16 %v1359, %v1351
    %v1536 = vpack.c.b16 %v1360, %v1352
    %v1537 = vpack.c.b16 %v1361, %v1353
    %v1538 = vpack.c.b16 %v1362, %v1354
    %v1539 = vpack.c.b16 %v1363, %v1355
    %v1540 = vpack.c.b16 %v1364, %v1356
    %v1541 = vpack.c.b16 %v1373, %v1365
    %v1542 = vpack.c.b16 %v1374, %v1366
    %v1543 = vpack.c.b16 %v1375, %v1367
    %v1544 = vpack.c.b16 %v1376, %v1368
    %v1545 = vpack.c.b16 %v1377, %v1369
    %v1546 = vpack.c.b16 %v1378, %v1370
    %v1547 = vpack.c.b16 %v1379, %v1371
    %v1548 = vpack.c.b16 %v1380, %v1372
    %v1549 = vpack.c.b16 %v1389, %v1381
    %v1550 = vpack.c.b16 %v1390, %v1382
    %v1551 = vpack.c.b16 %v1391, %v1383
    %v1552 = vpack.c.b16 %v1392, %v1384
    %v1553 = vpack.c.b16 %v1393, %v1385
    %v1554 = vpack.c.b16 %v1394, %v1386
    %v1555 = vpack.c.b16 %v1395, %v1387
    %v1556 = vpack.c.b16 %v1396, %v1388
    %v1557 = vpack.c.b16 %v1405, %v1397
    %v1558 = vpack.c.b16 %v1406, %v1398
    %v1559 = vpack.c.b16 %v1407, %v1399
    %v1560 = vpack.c.b16 %v1408, %v1400
    %v1561 = vpack.c.b16 %v1409, %v1401
    %v1562 = vpack.c.b16 %v1410, %v1402
    %v1563 = vpack.c.b16 %v1411, %v1403
    %v1564 = vpack.c.b16 %v1412, %v1404
    %v1565 = vpack.c.b16 %v1421, %v1413
    %v1566 = vpack.c.b16 %v1422, %v1414
    %v1567 = vpack.c.b16 %v1423, %v1415
    %v1568 = vpack.c.b16 %v1424, %v1416
    %v1569 = vpack.c.b16 %v1425, %v1417
    %v1570 = vpack.c.b16 %v1426, %v1418
    %v1571 = vpack.c.b16 %v1427, %v1419
    %v1572 = vpack.c.b16 %v1428, %v1420
    %v1573 = vpack.c.b16 %v1437, %v1429
    %v1574 = vpack.c.b16 %v1438, %v1430
    %v1575 = vpack.c.b16 %v1439, %v1431
    %v1576 = vpack.c.b16 %v1440, %v1432
    %v1577 = vpack.c.b16 %v1441, %v1433
    %v1578 = vpack.c.b16 %v1442, %v1434
    %v1579 = vpack.c.b16 %v1443, %v1435
    %v1580 = vpack.c.b16 %v1444, %v1436
    %v1581 = vpack.c.b16 %v1453, %v1445
    %v1582 = vpack.c.b16 %v1454, %v1446
    %v1583 = vpack.c.b16 %v1455, %v1447
    %v1584 = vpack.c.b16 %v1456, %v1448
    %v1585 = vpack.c.b16 %v1457, %v1449
    %v1586 = vpack.c.b16 %v1458, %v1450
    %v1587 = vpack.c.b16 %v1459, %v1451
    %v1588 = vpack.c.b16 %v1460, %v1452
    %1717 = vmatprep.subr.bf16.mxu0 %v1462
    %1718 = vmatpush1.bf16.msra.mxu0 %v1461
    %1719 = vmatprep.subr.bf16.mxu0 %v1470
    %1720 = vmatpush1.bf16.msra.mxu0 %v1469
    %1721 = vmatprep.subr.bf16.mxu0 %v1478
    %1722 = vmatpush1.bf16.msra.mxu0 %v1477
    %1723 = vmatprep.subr.bf16.mxu0 %v1486
    %1724 = vmatpush1.bf16.msra.mxu0 %v1485
    %1725 = vmatprep.subr.bf16.mxu0 %v1494
    %1726 = vmatpush1.bf16.msra.mxu0 %v1493
    %1727 = vmatprep.subr.bf16.mxu0 %v1502
    %1728 = vmatpush1.bf16.msra.mxu0 %v1501
    %1729 = vmatprep.subr.bf16.mxu0 %v1510
    %1730 = vmatpush1.bf16.msra.mxu0 %v1509
    %1731 = vmatprep.subr.bf16.mxu0 %v1518
    %1732 = vmatpush1.bf16.msra.mxu0 %v1517
    %1733 = vmatprep.subr.bf16.mxu0 %v1526
    %1734 = vmatpush1.bf16.msra.mxu0 %v1525
    %1735 = vmatprep.subr.bf16.mxu0 %v1534
    %1736 = vmatpush1.bf16.msra.mxu0 %v1533
    %1737 = vmatprep.subr.bf16.mxu0 %v1542
    %1738 = vmatpush1.bf16.msra.mxu0 %v1541
    %1739 = vmatprep.subr.bf16.mxu0 %v1550
    %1740 = vmatpush1.bf16.msra.mxu0 %v1549
    %1741 = vmatprep.subr.bf16.mxu0 %v1558
    %1742 = vmatpush1.bf16.msra.mxu0 %v1557
    %1743 = vmatprep.subr.bf16.mxu0 %v1566
    %1744 = vmatpush1.bf16.msra.mxu0 %v1565
    %1745 = vmatprep.subr.bf16.mxu0 %v1574
    %1746 = vmatpush1.bf16.msra.mxu0 %v1573
    %1747 = vmatprep.subr.bf16.mxu0 %v1582
    %1748 = vmatpush1.bf16.msra.mxu0 %v1581
    %1749 = vmatprep.mubr.bf16.mxu0 %v906
    %1750 = vmatmul.mubr.bf16.gmra.mrb[0].mxu0 %v905
    %v1751 = vpop.f32.mrb[0].mxu0
    %v1752 = vadd.f32 %v1040, %v1751
    %v1753 = vpop.f32.mrb[0].mxu0
    %v1754 = vadd.f32 %v1044, %v1753
    %v1755 = vpop.f32.mrb[0].mxu0
    %v1756 = vpop.f32.mrb[0].mxu0
    %1757 = vdwg.mxu0
    %1758 = vmatprep.subr.bf16.mxu0 %v1464
    %1759 = vmatpush1.bf16.msra.mxu0 %v1463
    %1760 = vmatprep.subr.bf16.mxu0 %v1472
    %1761 = vmatpush1.bf16.msra.mxu0 %v1471
    %1762 = vmatprep.subr.bf16.mxu0 %v1480
    %1763 = vmatpush1.bf16.msra.mxu0 %v1479
    %1764 = vmatprep.subr.bf16.mxu0 %v1488
    %1765 = vmatpush1.bf16.msra.mxu0 %v1487
    %1766 = vmatprep.subr.bf16.mxu0 %v1496
    %1767 = vmatpush1.bf16.msra.mxu0 %v1495
    %1768 = vmatprep.subr.bf16.mxu0 %v1504
    %1769 = vmatpush1.bf16.msra.mxu0 %v1503
    %1770 = vmatprep.subr.bf16.mxu0 %v1512
    %1771 = vmatpush1.bf16.msra.mxu0 %v1511
    %1772 = vmatprep.subr.bf16.mxu0 %v1520
    %1773 = vmatpush1.bf16.msra.mxu0 %v1519
    %1774 = vmatprep.subr.bf16.mxu0 %v1528
    %1775 = vmatpush1.bf16.msra.mxu0 %v1527
    %1776 = vmatprep.subr.bf16.mxu0 %v1536
    %1777 = vmatpush1.bf16.msra.mxu0 %v1535
    %1778 = vmatprep.subr.bf16.mxu0 %v1544
    %1779 = vmatpush1.bf16.msra.mxu0 %v1543
    %1780 = vmatprep.subr.bf16.mxu0 %v1552
    %1781 = vmatpush1.bf16.msra.mxu0 %v1551
    %1782 = vmatprep.subr.bf16.mxu0 %v1560
    %1783 = vmatpush1.bf16.msra.mxu0 %v1559
    %1784 = vmatprep.subr.bf16.mxu0 %v1568
    %1785 = vmatpush1.bf16.msra.mxu0 %v1567
    %1786 = vmatprep.subr.bf16.mxu0 %v1576
    %1787 = vmatpush1.bf16.msra.mxu0 %v1575
    %1788 = vmatprep.subr.bf16.mxu0 %v1584
    %1789 = vmatpush1.bf16.msra.mxu0 %v1583
    %1790 = vmatprep.mubr.bf16.mxu0 %v906
    %1791 = vmatmul.mubr.bf16.gmra.mrb[0].mxu0 %v905
    %v1792 = vpop.f32.mrb[0].mxu0
    %v1793 = vadd.f32 %v1048, %v1792
    %v1794 = vpop.f32.mrb[0].mxu0
    %v1795 = vadd.f32 %v1052, %v1794
    %v1796 = vpop.f32.mrb[0].mxu0
    %v1797 = vpop.f32.mrb[0].mxu0
    %1798 = vdwg.mxu0
    %1799 = vmatprep.subr.bf16.mxu0 %v1466
    %1800 = vmatpush1.bf16.msra.mxu0 %v1465
    %1801 = vmatprep.subr.bf16.mxu0 %v1474
    %1802 = vmatpush1.bf16.msra.mxu0 %v1473
    %1803 = vmatprep.subr.bf16.mxu0 %v1482
    %1804 = vmatpush1.bf16.msra.mxu0 %v1481
    %1805 = vmatprep.subr.bf16.mxu0 %v1490
    %1806 = vmatpush1.bf16.msra.mxu0 %v1489
    %1807 = vmatprep.subr.bf16.mxu0 %v1498
    %1808 = vmatpush1.bf16.msra.mxu0 %v1497
    %1809 = vmatprep.subr.bf16.mxu0 %v1506
    %1810 = vmatpush1.bf16.msra.mxu0 %v1505
    %1811 = vmatprep.subr.bf16.mxu0 %v1514
    %1812 = vmatpush1.bf16.msra.mxu0 %v1513
    %1813 = vmatprep.subr.bf16.mxu0 %v1522
    %1814 = vmatpush1.bf16.msra.mxu0 %v1521
    %1815 = vmatprep.subr.bf16.mxu0 %v1530
    %1816 = vmatpush1.bf16.msra.mxu0 %v1529
    %1817 = vmatprep.subr.bf16.mxu0 %v1538
    %1818 = vmatpush1.bf16.msra.mxu0 %v1537
    %1819 = vmatprep.subr.bf16.mxu0 %v1546
    %1820 = vmatpush1.bf16.msra.mxu0 %v1545
    %1821 = vmatprep.subr.bf16.mxu0 %v1554
    %1822 = vmatpush1.bf16.msra.mxu0 %v1553
    %1823 = vmatprep.subr.bf16.mxu0 %v1562
    %1824 = vmatpush1.bf16.msra.mxu0 %v1561
    %1825 = vmatprep.subr.bf16.mxu0 %v1570
    %1826 = vmatpush1.bf16.msra.mxu0 %v1569
    %1827 = vmatprep.subr.bf16.mxu0 %v1578
    %1828 = vmatpush1.bf16.msra.mxu0 %v1577
    %1829 = vmatprep.subr.bf16.mxu0 %v1586
    %1830 = vmatpush1.bf16.msra.mxu0 %v1585
    %1831 = vmatprep.mubr.bf16.mxu0 %v906
    %1832 = vmatmul.mubr.bf16.gmra.mrb[0].mxu0 %v905
    %v1833 = vpop.f32.mrb[0].mxu0
    %v1834 = vadd.f32 %v1056, %v1833
    %v1835 = vpop.f32.mrb[0].mxu0
    %v1836 = vadd.f32 %v1060, %v1835
    %v1837 = vpop.f32.mrb[0].mxu0
    %v1838 = vpop.f32.mrb[0].mxu0
    %1839 = vdwg.mxu0
    %1840 = vmatprep.subr.bf16.mxu0 %v1468
    %1841 = vmatpush1.bf16.msra.mxu0 %v1467
    %1842 = vmatprep.subr.bf16.mxu0 %v1476
    %1843 = vmatpush1.bf16.msra.mxu0 %v1475
    %1844 = vmatprep.subr.bf16.mxu0 %v1484
    %1845 = vmatpush1.bf16.msra.mxu0 %v1483
    %1846 = vmatprep.subr.bf16.mxu0 %v1492
    %1847 = vmatpush1.bf16.msra.mxu0 %v1491
    %1848 = vmatprep.subr.bf16.mxu0 %v1500
    %1849 = vmatpush1.bf16.msra.mxu0 %v1499
    %1850 = vmatprep.subr.bf16.mxu0 %v1508
    %1851 = vmatpush1.bf16.msra.mxu0 %v1507
    %1852 = vmatprep.subr.bf16.mxu0 %v1516
    %1853 = vmatpush1.bf16.msra.mxu0 %v1515
    %1854 = vmatprep.subr.bf16.mxu0 %v1524
    %1855 = vmatpush1.bf16.msra.mxu0 %v1523
    %1856 = vmatprep.subr.bf16.mxu0 %v1532
    %1857 = vmatpush1.bf16.msra.mxu0 %v1531
    %1858 = vmatprep.subr.bf16.mxu0 %v1540
    %1859 = vmatpush1.bf16.msra.mxu0 %v1539
    %1860 = vmatprep.subr.bf16.mxu0 %v1548
    %1861 = vmatpush1.bf16.msra.mxu0 %v1547
    %1862 = vmatprep.subr.bf16.mxu0 %v1556
    %1863 = vmatpush1.bf16.msra.mxu0 %v1555
    %1864 = vmatprep.subr.bf16.mxu0 %v1564
    %1865 = vmatpush1.bf16.msra.mxu0 %v1563
    %1866 = vmatprep.subr.bf16.mxu0 %v1572
    %1867 = vmatpush1.bf16.msra.mxu0 %v1571
    %1868 = vmatprep.subr.bf16.mxu0 %v1580
    %1869 = vmatpush1.bf16.msra.mxu0 %v1579
    %1870 = vmatprep.subr.bf16.mxu0 %v1588
    %1871 = vmatpush1.bf16.msra.mxu0 %v1587
    %1872 = vmatprep.mubr.bf16.mxu0 %v906
    %1873 = vmatmul.mubr.bf16.gmra.mrb[0].mxu0 %v905
    %v1874 = vpop.f32.mrb[0].mxu0
    %v1875 = vadd.f32 %v1064, %v1874
    %v1876 = vpop.f32.mrb[0].mxu0
    %v1877 = vadd.f32 %v1068, %v1876
    %v1878 = vpop.f32.mrb[0].mxu0
    %v1879 = vpop.f32.mrb[0].mxu0
    %1880 = vdwg.mxu0
    %v1889 = vcombine.low %v1752, %v1754
    %v1890 = vcombine.low %v1793, %v1795
    %v1892 = vunpack.c.l.s4 1983009808
    %v1893 = vunpack.c.0.s8 %v1892
    %v1894 = vlaneseq
    %v1895 = vshrl.u32 %v1894, 7
    %v1896 = vsub.s32 %v1893, %v1895
    %v1897 = vrot.slane %v1889, %v1896
    %v1899 = vunpack.c.l.s4 1983009808
    %v1900 = vunpack.c.0.s8 %v1899
    %v1901 = vlaneseq
    %v1902 = vshrl.u32 %v1901, 7
    %v1903 = vsub.s32 %v1900, %v1902
    %v1904 = vrot.slane %v1890, %v1903
    %v1905 = vcombine.low %v1897, %v1904
    %v1906 = vcombine.low %v1834, %v1836
    %v1907 = vcombine.low %v1875, %v1877
    %v1909 = vunpack.c.l.s4 1983009808
    %v1910 = vunpack.c.0.s8 %v1909
    %v1911 = vlaneseq
    %v1912 = vshrl.u32 %v1911, 7
    %v1913 = vsub.s32 %v1910, %v1912
    %v1914 = vrot.slane %v1906, %v1913
    %v1916 = vunpack.c.l.s4 1983009808
    %v1917 = vunpack.c.0.s8 %v1916
    %v1918 = vlaneseq
    %v1919 = vshrl.u32 %v1918, 7
    %v1920 = vsub.s32 %v1917, %v1919
    %v1921 = vrot.slane %v1907, %v1920
    %v1922 = vcombine.low %v1914, %v1921
    %1925 = vst [vmem:[#allocation5] sm:$0xff] %v1905
    %1926 = vst [vmem:[#allocation5 + $0x8] sm:$0xff] %v1922
    // Predicated region
    $region38: #{tpu_custom_call.1} parent=1 // pred_check
      _
    $region39: #{tpu_custom_call.1} parent=1 // pred_check_branch
      %1928 = sbr.rel (0) target = $region41
    $region40: #{tpu_custom_call.1} parent=1 // pred_region
      %s1930 = ssub.s32 256, 256
      %1931 = vsyncadd [#allocation4], %s1930
      %s1933 = sshll.u32 [#allocation5], 4
      %s1934 = int_to_ptr.vmem [resolvable:$true] %s1933
      %1936 = dma.vmem_to_hbm [thread:$0]  %s1934, 256, %s8, [#allocation4]
    $region41: #{tpu_custom_call.1} parent=1 // pred_fallthru
      _
    // Predicated region
    $region42: #{tpu_custom_call.1} parent=1 // pred_check
      _
    $region43: #{tpu_custom_call.1} parent=1 // pred_check_branch
      %1938 = sbr.rel (0) target = $region45
    $region44: #{tpu_custom_call.1} parent=1 // pred_region
      %1939 = dma.done [#allocation4], 256
    $region45: #{tpu_custom_call.1} parent=1 // pred_fallthru
      _
    %1940 = vsyncpa [#allocation3], 1
    %1941 = vsyncpa [#allocation4], 1

</llo_original>
